<compile_context>
chip_gen: v6e
topology: v6e:2x2x1
jax: 0.10.0
libtpu: 0.0.40
codegen_flags: <defaults>
</compile_context>

<pallas_src>
import math

import jax
import jax.numpy as jnp
from jax.experimental import pallas as pl
from jax.experimental.pallas import tpu as pltpu

_LANE = 128   # vreg lane width; mu and log_var each occupy one 128-lane group


def _round_up(v, m):
    return ((v + m - 1) // m) * m


# ---------------------------------------------------------------------------
# Pallas kernel: entire VAE forward for one batch tile.
# ---------------------------------------------------------------------------
def _bf16_linear(h, w_ref, b_ref):
    # MXU operands in bf16 (weights stored bf16, activation cast in-VMEM right
    # before the dot -- no-op if already bf16), f32 accumulation; bias-add f32.
    return jnp.dot(h.astype(jnp.bfloat16), w_ref[...],
                   preferred_element_type=jnp.float32) + b_ref[...]


def vae_forward_kernel(x_ref, eps_ref,
                       we0_ref, be0_ref, we1_ref, be1_ref, we2_ref, be2_ref,
                       wh_ref, bh_ref,
                       wd0_ref, bd0_ref, wd1_ref, bd1_ref,
                       wd2_ref, bd2_ref, wd3_ref, bd3_ref,
                       recon_ref, head_ref):
    h = x_ref[...]                                             # (bb, F)

    # ---- encoder: Base(state_stack, input_dim, architecture=encoder_arc) ----
    h = jnp.maximum(_bf16_linear(h, we0_ref, be0_ref), 0.0)    # F   -> 256
    h = jnp.maximum(_bf16_linear(h, we1_ref, be1_ref), 0.0)    # 256 -> 128
    h = jnp.maximum(_bf16_linear(h, we2_ref, be2_ref), 0.0)    # 128 -> 64

    # ---- fused, lane-aligned mu / log_var head: (64, 256) matmul ----
    # columns 0..L-1          = mu,       rest of lane-group 0 is zero
    # columns 128..128+L-1    = log_var,  rest of lane-group 1 is zero
    head = _bf16_linear(h, wh_ref, bh_ref)                     # (bb, 256) f32
    mu = head[:, :_LANE]                                       # free view
    log_var = head[:, _LANE:]                                  # free view

    # ---- reparameterize: eps * exp(0.5*log_var) + mu (f32, EUP exp) ----
    # padded lanes: exp(0)=1, eps=0, mu=0 -> z pad lanes are 0; the decoder
    # input weight has zero rows there anyway, so they contribute nothing.
    z = eps_ref[...] * jnp.exp(0.5 * log_var) + mu             # (bb, 128)

    # ---- decoder: Linear(latent, 64)+ReLU, then InverseBase ----
    d = jnp.maximum(_bf16_linear(z, wd0_ref, bd0_ref), 0.0)    # 128 -> 64
    d = jnp.maximum(_bf16_linear(d, wd1_ref, bd1_ref), 0.0)    # 64  -> 128
    d = jnp.maximum(_bf16_linear(d, wd2_ref, bd2_ref), 0.0)    # 128 -> 256
    d = jnp.maximum(_bf16_linear(d, wd3_ref, bd3_ref), 0.0)    # 256 -> F

    recon_ref[...] = d.astype(recon_ref.dtype)    # bf16 store halves writeback
    head_ref[...] = head                          # lane-dense 256-wide store


# ---------------------------------------------------------------------------
# Parameter construction (deterministic, PyTorch-Linear-style uniform init).
# Weights stored (in, out) bf16; biases (1, out) f32.
# mu/log_var heads are fused and zero-padded to (enc[-1], 2*128) with mu in
# lanes 0..L-1 and log_var in lanes 128..128+L-1; the decoder input weight is
# zero-row-padded from (L, dec[0]) to (128, dec[0]).
# ---------------------------------------------------------------------------
def init_linear(key, in_f, out_f):
    kw, kb = jax.random.split(key)
    bound = 1.0 / math.sqrt(in_f)
    w = jax.random.uniform(kw, (in_f, out_f), jnp.float32, -bound, bound)
    b = jax.random.uniform(kb, (1, out_f), jnp.float32, -bound, bound)
    return w, b


def make_vae_params(key, state_stack, input_dim,
                    encoder_arc=(256, 128, 64),
                    decoder_arc=(64, 128, 256),
                    latent_dim=32):
    assert latent_dim <= _LANE, "latent_dim must fit in one 128-lane group"
    F = state_stack * input_dim
    dims = []
    enc_in = [F] + list(encoder_arc[:-1])
    dims += list(zip(enc_in, list(encoder_arc)))                      # Base
    dims += [(encoder_arc[-1], latent_dim), (encoder_arc[-1], latent_dim)]  # mu, lv
    dims += [(latent_dim, decoder_arc[0])]                            # decoder in
    dims += list(zip(decoder_arc[:-1], decoder_arc[1:]))              # InverseBase
    dims += [(decoder_arc[-1], F)]

    keys = jax.random.split(key, len(dims))
    raw = [init_linear(k, i, o) for k, (i, o) in zip(keys, dims)]
    (we0, be0), (we1, be1), (we2, be2), (wmu, bmu), (wlv, blv), \
        (wd0, bd0), (wd1, bd1), (wd2, bd2), (wd3, bd3) = raw

    # fuse + lane-align mu / log_var heads -> (enc[-1], 2*128)
    wh = jnp.zeros((encoder_arc[-1], 2 * _LANE), jnp.float32)
    wh = wh.at[:, :latent_dim].set(wmu).at[:, _LANE:_LANE + latent_dim].set(wlv)
    bh = jnp.zeros((1, 2 * _LANE), jnp.float32)
    bh = bh.at[:, :latent_dim].set(bmu).at[:, _LANE:_LANE + latent_dim].set(blv)

    # zero-row-pad decoder input weight: latent_dim -> 128 rows
    wd0p = jnp.zeros((_LANE, decoder_arc[0]), jnp.float32).at[:latent_dim].set(wd0)

    params = []
    for w, b in [(we0, be0), (we1, be1), (we2, be2), (wh, bh),
                 (wd0p, bd0), (wd1, bd1), (wd2, bd2), (wd3, bd3)]:
        params += [w.astype(jnp.bfloat16), b.astype(jnp.float32)]
    return params   # flat list of 16 arrays


# ---------------------------------------------------------------------------
# Wrapper: flatten input (nn.Flatten), pad batch minimally, call the fused
# Pallas kernel with an even-count parallel batch grid and VMEM-resident
# weights.
#   block_b guidance: v5e ~1024, v6e 2048-4096, v7x <= 2048 per TC.
# ---------------------------------------------------------------------------
def vae_forward(x, eps, params, latent_dim, block_b=2048,
                recon_dtype=jnp.bfloat16):
    B = x.shape[0]
    F = math.prod(x.shape[1:])
    # nn.Flatten; keep the producer dtype (bf16 producers halve the input DMA,
    # f32 producers are cast to bf16 in-VMEM inside the kernel).
    x_flat = x.reshape(B, F)

    # eps zero-padded to a full 128-lane group so reparameterize is lane-aligned
    eps = eps.astype(jnp.float32)
    eps_pad = jnp.zeros((B, _LANE), jnp.float32).at[:, :latent_dim].set(eps)

    # Grid sizing: >= 2 steps and even (v7x 2-TC sharding); block rows chosen
    # to minimize padding instead of snapping up to block_b.
    n_steps = _round_up(max(2, pl.cdiv(B, block_b)), 2)
    bb = _round_up(max(pl.cdiv(B, n_steps), 1), 8)     # sublane-dense block
    Bp = bb * n_steps
    if Bp != B:
        x_flat = jnp.pad(x_flat, ((0, Bp - B), (0, 0)))
        eps_pad = jnp.pad(eps_pad, ((0, Bp - B), (0, 0)))
    grid = (n_steps,)

    def batch_spec(width):
        return pl.BlockSpec((bb, width), lambda i: (i, 0))

    def resident_spec(arr):
        # full-array block, same block index every grid step -> stays in VMEM
        return pl.BlockSpec(arr.shape, lambda i: (0, 0))

    in_specs = [batch_spec(F), batch_spec(_LANE)] + \
               [resident_spec(p) for p in params]
    out_specs = (batch_spec(F), batch_spec(2 * _LANE))

    # explicit VMEM budget (v5e scoped default is only 16 MiB); cap at 48 MiB
    # which is safe on all of v5e/v6e (128 MiB phys) and v7x (64 MiB phys/TC).
    w_bytes = sum(int(p.size) * p.dtype.itemsize for p in params)
    io_bytes = 2 * bb * (F * x_flat.dtype.itemsize            # x (dbl-buffered)
                         + _LANE * 4                          # eps
                         + F * jnp.dtype(recon_dtype).itemsize  # recon
                         + 2 * _LANE * 4)                     # head
    scratch_bytes = 8 * bb * max(F, 256) * 4                  # f32 intermediates
    vmem_limit = int(min(max(int(1.25 * (io_bytes + 2 * w_bytes + scratch_bytes)),
                             32 << 20), 48 << 20))

    flops_per_row = 2 * sum(int(w.shape[0]) * int(w.shape[1]) for w in params[0::2])
    cost = pl.CostEstimate(
        flops=flops_per_row * Bp,
        transcendentals=Bp * _LANE,
        bytes_accessed=w_bytes + io_bytes // 2 * n_steps,
    )

    recon, head = pl.pallas_call(
        vae_forward_kernel,
        out_shape=(
            jax.ShapeDtypeStruct((Bp, F), recon_dtype),
            jax.ShapeDtypeStruct((Bp, 2 * _LANE), jnp.float32),
        ),
        grid=grid,
        in_specs=in_specs,
        out_specs=out_specs,
        compiler_params=pltpu.CompilerParams(
            dimension_semantics=("parallel",),
            vmem_limit_bytes=vmem_limit),
        cost_estimate=cost,
    )(x_flat, eps_pad, *params)

    recon = recon[:B]
    mu = head[:B, :latent_dim]
    log_var = head[:B, _LANE:_LANE + latent_dim]
    # matches PyTorch forward: [decode(z), x, mu, log_var]
    return recon, x, mu, log_var


# ---------------------------------------------------------------------------
# Pure-JAX reference (mirrors the kernel's bf16-MXU / f32-accumulate numerics,
# using the logically-unpadded weight slices so the padding is verified to be
# semantically invisible).
# ---------------------------------------------------------------------------
def vae_forward_ref(x, eps, params, latent_dim):
    (we0, be0, we1, be1, we2, be2, wh, bh,
     wd0, bd0, wd1, bd1, wd2, bd2, wd3, bd3) = params
    L = latent_dim

    def lin(h, w, b):
        return jnp.dot(h.astype(jnp.bfloat16), w,
                       preferred_element_type=jnp.float32) + b

    B = x.shape[0]
    h = x.reshape(B, -1)
    h = jnp.maximum(lin(h, we0, be0), 0.0)
    h = jnp.maximum(lin(h, we1, be1), 0.0)
    h = jnp.maximum(lin(h, we2, be2), 0.0)
    mu = lin(h, wh[:, :L], bh[:, :L])
    log_var = lin(h, wh[:, _LANE:_LANE + L], bh[:, _LANE:_LANE + L])
    z = eps * jnp.exp(0.5 * log_var) + mu
    d = jnp.maximum(lin(z, wd0[:L], bd0), 0.0)
    d = jnp.maximum(lin(d, wd1, bd1), 0.0)
    d = jnp.maximum(lin(d, wd2, bd2), 0.0)
    d = jnp.maximum(lin(d, wd3, bd3), 0.0)
    return d, mu, log_var


if __name__ == "__main__":
    # Small shapes consistent with the module:
    # state_stack=4, input_dim=64 -> flattened feature dim F=256 (= encoder_arc[0])
    B, state_stack, input_dim, latent_dim = 2, 4, 64, 32
    encoder_arc = (256, 128, 64)
    decoder_arc = (64, 128, 256)

    root = jax.random.PRNGKey(0)
    k_x, k_eps, k_params = jax.random.split(root, 3)

    x = jax.random.normal(k_x, (B, state_stack, input_dim), jnp.float32)
    eps = jax.random.normal(k_eps, (B, latent_dim), jnp.float32)  # randn_like(std)
    params = make_vae_params(k_params, state_stack, input_dim,
                             encoder_arc, decoder_arc, latent_dim)

    recon, x_out, mu, log_var = vae_forward(x, eps, params, latent_dim)
    jax.block_until_ready((recon, mu, log_var))

    # sanity check against pure-JAX reference (same bf16-MXU numerics; recon is
    # stored bf16 in the kernel -> slightly looser tolerance there)
    r_ref, mu_ref, lv_ref = vae_forward_ref(x, eps, params, latent_dim)
    assert recon.shape == (B, state_stack * input_dim)
    assert mu.shape == (B, latent_dim) and log_var.shape == (B, latent_dim)
    assert jnp.allclose(mu, mu_ref, atol=1e-3, rtol=1e-3)
    assert jnp.allclose(log_var, lv_ref, atol=1e-3, rtol=1e-3)
    assert jnp.allclose(recon.astype(jnp.float32), r_ref, atol=2e-2, rtol=2e-2)

    print("KERNEL_OK")
</pallas_src>

<mosaic_0001>
module attributes {stable_mosaic.version = 11 : i64} {
  func.func @vae_forward_kernel(%arg0: i32, %arg1: memref<8x256xf32, #tpu.memory_space<vmem>>, %arg2: memref<8x128xf32, #tpu.memory_space<vmem>>, %arg3: memref<256x256xbf16, #tpu.memory_space<vmem>>, %arg4: memref<1x256xf32, #tpu.memory_space<vmem>>, %arg5: memref<256x128xbf16, #tpu.memory_space<vmem>>, %arg6: memref<1x128xf32, #tpu.memory_space<vmem>>, %arg7: memref<128x64xbf16, #tpu.memory_space<vmem>>, %arg8: memref<1x64xf32, #tpu.memory_space<vmem>>, %arg9: memref<64x256xbf16, #tpu.memory_space<vmem>>, %arg10: memref<1x256xf32, #tpu.memory_space<vmem>>, %arg11: memref<128x64xbf16, #tpu.memory_space<vmem>>, %arg12: memref<1x64xf32, #tpu.memory_space<vmem>>, %arg13: memref<64x128xbf16, #tpu.memory_space<vmem>>, %arg14: memref<1x128xf32, #tpu.memory_space<vmem>>, %arg15: memref<128x256xbf16, #tpu.memory_space<vmem>>, %arg16: memref<1x256xf32, #tpu.memory_space<vmem>>, %arg17: memref<256x256xbf16, #tpu.memory_space<vmem>>, %arg18: memref<1x256xf32, #tpu.memory_space<vmem>>, %arg19: memref<8x256xbf16, #tpu.memory_space<vmem>>, %arg20: memref<8x256xf32, #tpu.memory_space<vmem>>) attributes {dimension_semantics = [#tpu.dimension_semantics<parallel>], iteration_bounds = array<i64: 2>, scalar_prefetch = 0 : i64, scratch_operands = 0 : i64, tpu.core_type = #tpu.core_type<tc>, window_params = [{transform_indices = @transform_0, window_bounds = array<i64: 8, 256>}, {transform_indices = @transform_1, window_bounds = array<i64: 8, 128>}, {pipeline_mode = #tpu.pipeline_mode<synchronous>, transform_indices = @transform_2, window_bounds = array<i64: 256, 256>}, {pipeline_mode = #tpu.pipeline_mode<synchronous>, transform_indices = @transform_3, window_bounds = array<i64: 1, 256>}, {pipeline_mode = #tpu.pipeline_mode<synchronous>, transform_indices = @transform_4, window_bounds = array<i64: 256, 128>}, {pipeline_mode = #tpu.pipeline_mode<synchronous>, transform_indices = @transform_5, window_bounds = array<i64: 1, 128>}, {pipeline_mode = #tpu.pipeline_mode<synchronous>, transform_indices = @transform_6, window_bounds = array<i64: 128, 64>}, {pipeline_mode = #tpu.pipeline_mode<synchronous>, transform_indices = @transform_7, window_bounds = array<i64: 1, 64>}, {pipeline_mode = #tpu.pipeline_mode<synchronous>, transform_indices = @transform_8, window_bounds = array<i64: 64, 256>}, {pipeline_mode = #tpu.pipeline_mode<synchronous>, transform_indices = @transform_9, window_bounds = array<i64: 1, 256>}, {pipeline_mode = #tpu.pipeline_mode<synchronous>, transform_indices = @transform_10, window_bounds = array<i64: 128, 64>}, {pipeline_mode = #tpu.pipeline_mode<synchronous>, transform_indices = @transform_11, window_bounds = array<i64: 1, 64>}, {pipeline_mode = #tpu.pipeline_mode<synchronous>, transform_indices = @transform_12, window_bounds = array<i64: 64, 128>}, {pipeline_mode = #tpu.pipeline_mode<synchronous>, transform_indices = @transform_13, window_bounds = array<i64: 1, 128>}, {pipeline_mode = #tpu.pipeline_mode<synchronous>, transform_indices = @transform_14, window_bounds = array<i64: 128, 256>}, {pipeline_mode = #tpu.pipeline_mode<synchronous>, transform_indices = @transform_15, window_bounds = array<i64: 1, 256>}, {pipeline_mode = #tpu.pipeline_mode<synchronous>, transform_indices = @transform_16, window_bounds = array<i64: 256, 256>}, {pipeline_mode = #tpu.pipeline_mode<synchronous>, transform_indices = @transform_17, window_bounds = array<i64: 1, 256>}, {transform_indices = @transform_18, window_bounds = array<i64: 8, 256>}, {transform_indices = @transform_19, window_bounds = array<i64: 8, 256>}]} {
    %c0 = arith.constant 0 : index
    %c0_0 = arith.constant 0 : index
    %0 = vector.load %arg1[%c0, %c0_0] : memref<8x256xf32, #tpu.memory_space<vmem>>, vector<8x256xf32>
    %1 = arith.truncf %0 : vector<8x256xf32> to vector<8x256xbf16>
    %c0_1 = arith.constant 0 : index
    %c0_2 = arith.constant 0 : index
    %2 = vector.load %arg3[%c0_1, %c0_2] : memref<256x256xbf16, #tpu.memory_space<vmem>>, vector<256x256xbf16>
    %cst = arith.constant dense<0.000000e+00> : vector<8x256xf32>
    %3 = tpu.matmul %1, %2, %cst {dimension_numbers = #tpu.dot_dimension_numbers<[1], [0], [0], [1], [0, 0, 1, 1], [], []>} : vector<8x256xbf16>, vector<256x256xbf16>, vector<8x256xf32> -> vector<8x256xf32>
    %c0_3 = arith.constant 0 : index
    %c0_4 = arith.constant 0 : index
    %4 = vector.load %arg4[%c0_3, %c0_4] : memref<1x256xf32, #tpu.memory_space<vmem>>, vector<1x256xf32>
    %5 = vector.broadcast %4 : vector<1x256xf32> to vector<8x256xf32>
    %6 = arith.addf %3, %5 : vector<8x256xf32>
    %cst_5 = arith.constant 0.000000e+00 : f32
    %7 = vector.broadcast %cst_5 : f32 to vector<8x256xf32>
    %8 = arith.maximumf %6, %7 : vector<8x256xf32>
    %9 = arith.truncf %8 : vector<8x256xf32> to vector<8x256xbf16>
    %c0_6 = arith.constant 0 : index
    %c0_7 = arith.constant 0 : index
    %10 = vector.load %arg5[%c0_6, %c0_7] : memref<256x128xbf16, #tpu.memory_space<vmem>>, vector<256x128xbf16>
    %cst_8 = arith.constant dense<0.000000e+00> : vector<8x128xf32>
    %11 = tpu.matmul %9, %10, %cst_8 {dimension_numbers = #tpu.dot_dimension_numbers<[1], [0], [0], [1], [0, 0, 1, 1], [], []>} : vector<8x256xbf16>, vector<256x128xbf16>, vector<8x128xf32> -> vector<8x128xf32>
    %c0_9 = arith.constant 0 : index
    %c0_10 = arith.constant 0 : index
    %12 = vector.load %arg6[%c0_9, %c0_10] : memref<1x128xf32, #tpu.memory_space<vmem>>, vector<1x128xf32>
    %13 = vector.broadcast %12 : vector<1x128xf32> to vector<8x128xf32>
    %14 = arith.addf %11, %13 : vector<8x128xf32>
    %cst_11 = arith.constant 0.000000e+00 : f32
    %15 = vector.broadcast %cst_11 : f32 to vector<8x128xf32>
    %16 = arith.maximumf %14, %15 : vector<8x128xf32>
    %17 = arith.truncf %16 : vector<8x128xf32> to vector<8x128xbf16>
    %c0_12 = arith.constant 0 : index
    %c0_13 = arith.constant 0 : index
    %18 = vector.load %arg7[%c0_12, %c0_13] : memref<128x64xbf16, #tpu.memory_space<vmem>>, vector<128x64xbf16>
    %cst_14 = arith.constant dense<0.000000e+00> : vector<8x64xf32>
    %19 = tpu.matmul %17, %18, %cst_14 {dimension_numbers = #tpu.dot_dimension_numbers<[1], [0], [0], [1], [0, 0, 1, 1], [], []>} : vector<8x128xbf16>, vector<128x64xbf16>, vector<8x64xf32> -> vector<8x64xf32>
    %c0_15 = arith.constant 0 : index
    %c0_16 = arith.constant 0 : index
    %20 = vector.load %arg8[%c0_15, %c0_16] : memref<1x64xf32, #tpu.memory_space<vmem>>, vector<1x64xf32>
    %21 = vector.broadcast %20 : vector<1x64xf32> to vector<8x64xf32>
    %22 = arith.addf %19, %21 : vector<8x64xf32>
    %cst_17 = arith.constant 0.000000e+00 : f32
    %23 = vector.broadcast %cst_17 : f32 to vector<8x64xf32>
    %24 = arith.maximumf %22, %23 : vector<8x64xf32>
    %25 = arith.truncf %24 : vector<8x64xf32> to vector<8x64xbf16>
    %c0_18 = arith.constant 0 : index
    %c0_19 = arith.constant 0 : index
    %26 = vector.load %arg9[%c0_18, %c0_19] : memref<64x256xbf16, #tpu.memory_space<vmem>>, vector<64x256xbf16>
    %cst_20 = arith.constant dense<0.000000e+00> : vector<8x256xf32>
    %27 = tpu.matmul %25, %26, %cst_20 {dimension_numbers = #tpu.dot_dimension_numbers<[1], [0], [0], [1], [0, 0, 1, 1], [], []>} : vector<8x64xbf16>, vector<64x256xbf16>, vector<8x256xf32> -> vector<8x256xf32>
    %c0_21 = arith.constant 0 : index
    %c0_22 = arith.constant 0 : index
    %28 = vector.load %arg10[%c0_21, %c0_22] : memref<1x256xf32, #tpu.memory_space<vmem>>, vector<1x256xf32>
    %29 = vector.broadcast %28 : vector<1x256xf32> to vector<8x256xf32>
    %30 = arith.addf %27, %29 : vector<8x256xf32>
    %31 = vector.extract_strided_slice %30 {offsets = [0, 0], sizes = [8, 128], strides = [1, 1]} : vector<8x256xf32> to vector<8x128xf32>
    %32 = vector.extract_strided_slice %30 {offsets = [0, 128], sizes = [8, 128], strides = [1, 1]} : vector<8x256xf32> to vector<8x128xf32>
    %c0_23 = arith.constant 0 : index
    %c0_24 = arith.constant 0 : index
    %33 = vector.load %arg2[%c0_23, %c0_24] : memref<8x128xf32, #tpu.memory_space<vmem>>, vector<8x128xf32>
    %cst_25 = arith.constant 5.000000e-01 : f32
    %34 = vector.broadcast %cst_25 : f32 to vector<8x128xf32>
    %35 = arith.mulf %34, %32 : vector<8x128xf32>
    %36 = math.exp %35 : vector<8x128xf32>
    %37 = arith.mulf %33, %36 : vector<8x128xf32>
    %38 = arith.addf %37, %31 : vector<8x128xf32>
    %39 = arith.truncf %38 : vector<8x128xf32> to vector<8x128xbf16>
    %c0_26 = arith.constant 0 : index
    %c0_27 = arith.constant 0 : index
    %40 = vector.load %arg11[%c0_26, %c0_27] : memref<128x64xbf16, #tpu.memory_space<vmem>>, vector<128x64xbf16>
    %cst_28 = arith.constant dense<0.000000e+00> : vector<8x64xf32>
    %41 = tpu.matmul %39, %40, %cst_28 {dimension_numbers = #tpu.dot_dimension_numbers<[1], [0], [0], [1], [0, 0, 1, 1], [], []>} : vector<8x128xbf16>, vector<128x64xbf16>, vector<8x64xf32> -> vector<8x64xf32>
    %c0_29 = arith.constant 0 : index
    %c0_30 = arith.constant 0 : index
    %42 = vector.load %arg12[%c0_29, %c0_30] : memref<1x64xf32, #tpu.memory_space<vmem>>, vector<1x64xf32>
    %43 = vector.broadcast %42 : vector<1x64xf32> to vector<8x64xf32>
    %44 = arith.addf %41, %43 : vector<8x64xf32>
    %cst_31 = arith.constant 0.000000e+00 : f32
    %45 = vector.broadcast %cst_31 : f32 to vector<8x64xf32>
    %46 = arith.maximumf %44, %45 : vector<8x64xf32>
    %47 = arith.truncf %46 : vector<8x64xf32> to vector<8x64xbf16>
    %c0_32 = arith.constant 0 : index
    %c0_33 = arith.constant 0 : index
    %48 = vector.load %arg13[%c0_32, %c0_33] : memref<64x128xbf16, #tpu.memory_space<vmem>>, vector<64x128xbf16>
    %cst_34 = arith.constant dense<0.000000e+00> : vector<8x128xf32>
    %49 = tpu.matmul %47, %48, %cst_34 {dimension_numbers = #tpu.dot_dimension_numbers<[1], [0], [0], [1], [0, 0, 1, 1], [], []>} : vector<8x64xbf16>, vector<64x128xbf16>, vector<8x128xf32> -> vector<8x128xf32>
    %c0_35 = arith.constant 0 : index
    %c0_36 = arith.constant 0 : index
    %50 = vector.load %arg14[%c0_35, %c0_36] : memref<1x128xf32, #tpu.memory_space<vmem>>, vector<1x128xf32>
    %51 = vector.broadcast %50 : vector<1x128xf32> to vector<8x128xf32>
    %52 = arith.addf %49, %51 : vector<8x128xf32>
    %cst_37 = arith.constant 0.000000e+00 : f32
    %53 = vector.broadcast %cst_37 : f32 to vector<8x128xf32>
    %54 = arith.maximumf %52, %53 : vector<8x128xf32>
    %55 = arith.truncf %54 : vector<8x128xf32> to vector<8x128xbf16>
    %c0_38 = arith.constant 0 : index
    %c0_39 = arith.constant 0 : index
    %56 = vector.load %arg15[%c0_38, %c0_39] : memref<128x256xbf16, #tpu.memory_space<vmem>>, vector<128x256xbf16>
    %cst_40 = arith.constant dense<0.000000e+00> : vector<8x256xf32>
    %57 = tpu.matmul %55, %56, %cst_40 {dimension_numbers = #tpu.dot_dimension_numbers<[1], [0], [0], [1], [0, 0, 1, 1], [], []>} : vector<8x128xbf16>, vector<128x256xbf16>, vector<8x256xf32> -> vector<8x256xf32>
    %c0_41 = arith.constant 0 : index
    %c0_42 = arith.constant 0 : index
    %58 = vector.load %arg16[%c0_41, %c0_42] : memref<1x256xf32, #tpu.memory_space<vmem>>, vector<1x256xf32>
    %59 = vector.broadcast %58 : vector<1x256xf32> to vector<8x256xf32>
    %60 = arith.addf %57, %59 : vector<8x256xf32>
    %cst_43 = arith.constant 0.000000e+00 : f32
    %61 = vector.broadcast %cst_43 : f32 to vector<8x256xf32>
    %62 = arith.maximumf %60, %61 : vector<8x256xf32>
    %63 = arith.truncf %62 : vector<8x256xf32> to vector<8x256xbf16>
    %c0_44 = arith.constant 0 : index
    %c0_45 = arith.constant 0 : index
    %64 = vector.load %arg17[%c0_44, %c0_45] : memref<256x256xbf16, #tpu.memory_space<vmem>>, vector<256x256xbf16>
    %cst_46 = arith.constant dense<0.000000e+00> : vector<8x256xf32>
    %65 = tpu.matmul %63, %64, %cst_46 {dimension_numbers = #tpu.dot_dimension_numbers<[1], [0], [0], [1], [0, 0, 1, 1], [], []>} : vector<8x256xbf16>, vector<256x256xbf16>, vector<8x256xf32> -> vector<8x256xf32>
    %c0_47 = arith.constant 0 : index
    %c0_48 = arith.constant 0 : index
    %66 = vector.load %arg18[%c0_47, %c0_48] : memref<1x256xf32, #tpu.memory_space<vmem>>, vector<1x256xf32>
    %67 = vector.broadcast %66 : vector<1x256xf32> to vector<8x256xf32>
    %68 = arith.addf %65, %67 : vector<8x256xf32>
    %cst_49 = arith.constant 0.000000e+00 : f32
    %69 = vector.broadcast %cst_49 : f32 to vector<8x256xf32>
    %70 = arith.maximumf %68, %69 : vector<8x256xf32>
    %71 = arith.truncf %70 : vector<8x256xf32> to vector<8x256xbf16>
    %c0_50 = arith.constant 0 : index
    %c0_51 = arith.constant 0 : index
    %72 = vector.load %arg19[%c0_50, %c0_51] : memref<8x256xbf16, #tpu.memory_space<vmem>>, vector<8x256xbf16>
    tpu.vector_store %arg19[%c0_50, %c0_51], %71 {strides = array<i32>} : memref<8x256xbf16, #tpu.memory_space<vmem>>, vector<8x256xbf16>,
    %c0_52 = arith.constant 0 : index
    %c0_53 = arith.constant 0 : index
    %73 = vector.load %arg20[%c0_52, %c0_53] : memref<8x256xf32, #tpu.memory_space<vmem>>, vector<8x256xf32>
    tpu.vector_store %arg20[%c0_52, %c0_53], %30 {strides = array<i32>} : memref<8x256xf32, #tpu.memory_space<vmem>>, vector<8x256xf32>,
    return
  }
  func.func @transform_0(%arg0: i32) -> (i32, i32) {
    %c0_i32 = arith.constant 0 : i32
    %c0_i32_0 = arith.constant 0 : i32
    return %arg0, %c0_i32 : i32, i32
  }
  func.func @transform_1(%arg0: i32) -> (i32, i32) {
    %c0_i32 = arith.constant 0 : i32
    %c0_i32_0 = arith.constant 0 : i32
    return %arg0, %c0_i32 : i32, i32
  }
  func.func @transform_2(%arg0: i32) -> (i32, i32) {
    %c0_i32 = arith.constant 0 : i32
    %c0_i32_0 = arith.constant 0 : i32
    %c0_i32_1 = arith.constant 0 : i32
    return %c0_i32, %c0_i32_0 : i32, i32
  }
  func.func @transform_3(%arg0: i32) -> (i32, i32) {
    %c0_i32 = arith.constant 0 : i32
    %c0_i32_0 = arith.constant 0 : i32
    %c0_i32_1 = arith.constant 0 : i32
    return %c0_i32, %c0_i32_0 : i32, i32
  }
  func.func @transform_4(%arg0: i32) -> (i32, i32) {
    %c0_i32 = arith.constant 0 : i32
    %c0_i32_0 = arith.constant 0 : i32
    %c0_i32_1 = arith.constant 0 : i32
    return %c0_i32, %c0_i32_0 : i32, i32
  }
  func.func @transform_5(%arg0: i32) -> (i32, i32) {
    %c0_i32 = arith.constant 0 : i32
    %c0_i32_0 = arith.constant 0 : i32
    %c0_i32_1 = arith.constant 0 : i32
    return %c0_i32, %c0_i32_0 : i32, i32
  }
  func.func @transform_6(%arg0: i32) -> (i32, i32) {
    %c0_i32 = arith.constant 0 : i32
    %c0_i32_0 = arith.constant 0 : i32
    %c0_i32_1 = arith.constant 0 : i32
    return %c0_i32, %c0_i32_0 : i32, i32
  }
  func.func @transform_7(%arg0: i32) -> (i32, i32) {
    %c0_i32 = arith.constant 0 : i32
    %c0_i32_0 = arith.constant 0 : i32
    %c0_i32_1 = arith.constant 0 : i32
    return %c0_i32, %c0_i32_0 : i32, i32
  }
  func.func @transform_8(%arg0: i32) -> (i32, i32) {
    %c0_i32 = arith.constant 0 : i32
    %c0_i32_0 = arith.constant 0 : i32
    %c0_i32_1 = arith.constant 0 : i32
    return %c0_i32, %c0_i32_0 : i32, i32
  }
  func.func @transform_9(%arg0: i32) -> (i32, i32) {
    %c0_i32 = arith.constant 0 : i32
    %c0_i32_0 = arith.constant 0 : i32
    %c0_i32_1 = arith.constant 0 : i32
    return %c0_i32, %c0_i32_0 : i32, i32
  }
  func.func @transform_10(%arg0: i32) -> (i32, i32) {
    %c0_i32 = arith.constant 0 : i32
    %c0_i32_0 = arith.constant 0 : i32
    %c0_i32_1 = arith.constant 0 : i32
    return %c0_i32, %c0_i32_0 : i32, i32
  }
  func.func @transform_11(%arg0: i32) -> (i32, i32) {
    %c0_i32 = arith.constant 0 : i32
    %c0_i32_0 = arith.constant 0 : i32
    %c0_i32_1 = arith.constant 0 : i32
    return %c0_i32, %c0_i32_0 : i32, i32
  }
  func.func @transform_12(%arg0: i32) -> (i32, i32) {
    %c0_i32 = arith.constant 0 : i32
    %c0_i32_0 = arith.constant 0 : i32
    %c0_i32_1 = arith.constant 0 : i32
    return %c0_i32, %c0_i32_0 : i32, i32
  }
  func.func @transform_13(%arg0: i32) -> (i32, i32) {
    %c0_i32 = arith.constant 0 : i32
    %c0_i32_0 = arith.constant 0 : i32
    %c0_i32_1 = arith.constant 0 : i32
    return %c0_i32, %c0_i32_0 : i32, i32
  }
  func.func @transform_14(%arg0: i32) -> (i32, i32) {
    %c0_i32 = arith.constant 0 : i32
    %c0_i32_0 = arith.constant 0 : i32
    %c0_i32_1 = arith.constant 0 : i32
    return %c0_i32, %c0_i32_0 : i32, i32
  }
  func.func @transform_15(%arg0: i32) -> (i32, i32) {
    %c0_i32 = arith.constant 0 : i32
    %c0_i32_0 = arith.constant 0 : i32
    %c0_i32_1 = arith.constant 0 : i32
    return %c0_i32, %c0_i32_0 : i32, i32
  }
  func.func @transform_16(%arg0: i32) -> (i32, i32) {
    %c0_i32 = arith.constant 0 : i32
    %c0_i32_0 = arith.constant 0 : i32
    %c0_i32_1 = arith.constant 0 : i32
    return %c0_i32, %c0_i32_0 : i32, i32
  }
  func.func @transform_17(%arg0: i32) -> (i32, i32) {
    %c0_i32 = arith.constant 0 : i32
    %c0_i32_0 = arith.constant 0 : i32
    %c0_i32_1 = arith.constant 0 : i32
    return %c0_i32, %c0_i32_0 : i32, i32
  }
  func.func @transform_18(%arg0: i32) -> (i32, i32) {
    %c0_i32 = arith.constant 0 : i32
    %c0_i32_0 = arith.constant 0 : i32
    return %arg0, %c0_i32 : i32, i32
  }
  func.func @transform_19(%arg0: i32) -> (i32, i32) {
    %c0_i32 = arith.constant 0 : i32
    %c0_i32_0 = arith.constant 0 : i32
    return %arg0, %c0_i32 : i32, i32
  }
}

</mosaic_0001>

<llo_original>
// kernel: tpu_custom_call.1
$region0: #{tpu_custom_call.1}
  #allocation0 [shape = 'u32[]', space=smem, size = 0x4, offset = 0x4, fixed_abs, tag = 'smem constant byte address 0x4 - core index']
  #allocation1 [shape = 'u32[144,128]{1,0:T(1,128)}', space=vmem, size = 0x12000, scoped, tag = 'internal scratch']
  %s0 = inlined_call_operand.hbm [shape: f32[16,256], index: 0, kind: input, shape index: {}]
  %s1 = inlined_call_operand.hbm [shape: f32[16,128], index: 1, kind: input, shape index: {}]
  %s2 = inlined_call_operand.hbm [shape: bf16[256,256], index: 2, kind: input, shape index: {}]
  %s3 = inlined_call_operand.vmem [shape: f32[1,256], index: 3, kind: input, shape index: {}]
  %s4 = inlined_call_operand.vmem [shape: bf16[256,128], index: 4, kind: input, shape index: {}]
  %s5 = inlined_call_operand.vmem [shape: f32[1,128], index: 5, kind: input, shape index: {}]
  %s6 = inlined_call_operand.vmem [shape: bf16[128,64], index: 6, kind: input, shape index: {}]
  %s7 = inlined_call_operand.vmem [shape: f32[1,64], index: 7, kind: input, shape index: {}]
  %s8 = inlined_call_operand.vmem [shape: bf16[64,256], index: 8, kind: input, shape index: {}]
  %s9 = inlined_call_operand.vmem [shape: f32[1,256], index: 9, kind: input, shape index: {}]
  %s10 = inlined_call_operand.vmem [shape: bf16[128,64], index: 10, kind: input, shape index: {}]
  %s11 = inlined_call_operand.vmem [shape: f32[1,64], index: 11, kind: input, shape index: {}]
  %s12 = inlined_call_operand.hbm [shape: bf16[64,128], index: 12, kind: input, shape index: {}]
  %s13 = inlined_call_operand.vmem [shape: f32[1,128], index: 13, kind: input, shape index: {}]
  %s14 = inlined_call_operand.hbm [shape: bf16[128,256], index: 14, kind: input, shape index: {}]
  %s15 = inlined_call_operand.vmem [shape: f32[1,256], index: 15, kind: input, shape index: {}]
  %s16 = inlined_call_operand.hbm [shape: bf16[256,256], index: 16, kind: input, shape index: {}]
  %s17 = inlined_call_operand.vmem [shape: f32[1,256], index: 17, kind: input, shape index: {}]
  %s18 = inlined_call_operand.hbm [shape: bf16[16,256], index: 18, kind: output, shape index: {0}]
  %s19 = inlined_call_operand.hbm [shape: f32[16,256], index: 19, kind: output, shape index: {1}]
  %20 = xla_tuple %s18, %s19
  %s21 = sld [smem:[#allocation0]]
  $region137: #{tpu_custom_call.1} parent=0
    _
  %s23 = ssub.s32 1, %s21
  %s24 = scalar_select 0, %s23, %s21
  $region1: #{tpu_custom_call.1} parent=0
    #allocation2 [shape = 'u8[16384]{0}', space=vmem, size = 0x4000, scoped, tag = 'input window, operand 0']
    #allocation3 [shape = 's32[2]{0}', space=sflag, size = 0x8, scoped, tag = 'scoped memory for tpu_custom_call.1']
    #allocation4 [shape = 's32[2]{0}', space=sflag, size = 0x8, scoped, tag = 'scoped memory for tpu_custom_call.1']
    #allocation5 [shape = 'u8[8192]{0}', space=vmem, size = 0x2000, scoped, tag = 'input window, operand 1']
    #allocation6 [shape = 's32[2]{0}', space=sflag, size = 0x8, scoped, tag = 'scoped memory for tpu_custom_call.1']
    #allocation7 [shape = 'u8[131072]{0}', space=vmem, size = 0x20000, scoped, tag = 'input window, operand 2, single buffered']
    #allocation8 [shape = 'u8[16384]{0}', space=vmem, size = 0x4000, scoped, tag = 'input window, operand 12, single buffered']
    #allocation9 [shape = 's32[1]{0}', space=sflag, size = 0x4, scoped, tag = 'scoped memory for tpu_custom_call.1']
    #allocation10 [shape = 'u8[65536]{0}', space=vmem, size = 0x10000, scoped, tag = 'input window, operand 14, single buffered']
    #allocation11 [shape = 'u8[131072]{0}', space=vmem, size = 0x20000, scoped, tag = 'input window, operand 16, single buffered']
    #allocation12 [shape = 's32[1]{0}', space=sflag, size = 0x4, scoped, tag = 'scoped memory for tpu_custom_call.1']
    #allocation13 [shape = 'u8[8192]{0}', space=vmem, size = 0x2000, scoped, tag = 'output window, operand 0']
    #allocation14 [shape = 'u8[16384]{0}', space=vmem, size = 0x4000, scoped, tag = 'output window, operand 1']
    #allocation15 [shape = 's32[2]{0}', space=sflag, size = 0x8, scoped, tag = 'scoped memory for tpu_custom_call.1']
    %25 = vsyncpa [#allocation3], 0
    %s26 = scalar_lea.sflag [#allocation3], 1
    %27 = vsyncpa %s26, 0
    %28 = vsyncpa [#allocation6], 0
    %s29 = scalar_lea.sflag [#allocation6], 1
    %30 = vsyncpa %s29, 0
    %31 = vsyncpa [#allocation9], 0
    %32 = vsyncpa [#allocation12], 0
    %33 = vsyncpa [#allocation4], 0
    %s34 = scalar_lea.sflag [#allocation4], 1
    %35 = vsyncpa %s34, 0
    %36 = vsyncpa [#allocation15], 0
    %s37 = scalar_lea.sflag [#allocation15], 1
    %38 = vsyncpa %s37, 0
    loop: start=0, step=1, limit=4
    $region2: #{tpu_custom_call.1} parent=1 // loop_pre_header
      _
    $region3: #{tpu_custom_call.1} parent=1 // loop_header
      %s40 = sphi 0, %s44
      %p41 = scmp.ge.s32.totalorder %s40, 4
      %s50 = sphi 0, %s52
      %s53 = sphi 0, %s50
      %s54 = sphi 0, %s53
      %s70 = sphi 0, %s54
      %s76 = sphi 0, %s78
      %s79 = sphi 0, %s76
      %s80 = sphi 0, %s79
      %s96 = sphi 0, %s80
      %s100 = sphi 0, %s100
      %s102 = sphi 0, %s100
      %s103 = sphi 0, %s102
      %s117 = sphi 0, %s103
      %s121 = sphi 0, %s121
      %s123 = sphi 0, %s121
      %s124 = sphi 0, %s123
      %s138 = sphi 0, %s124
      %s142 = sphi 0, %s142
      %s144 = sphi 0, %s142
      %s145 = sphi 0, %s144
      %s159 = sphi 0, %s145
      %s163 = sphi 0, %s163
      %s165 = sphi 0, %s163
      %s166 = sphi 0, %s165
      %s180 = sphi 0, %s166
      %s184 = sphi 0, %s184
      %s186 = sphi 0, %s184
      %s187 = sphi 0, %s186
      %s201 = sphi 0, %s187
      %s205 = sphi 0, %s205
      %s207 = sphi 0, %s205
      %s208 = sphi 0, %s207
      %s222 = sphi 0, %s208
      %s226 = sphi 0, %s226
      %s228 = sphi 0, %s226
      %s229 = sphi 0, %s228
      %s243 = sphi 0, %s229
      %s247 = sphi 0, %s247
      %s249 = sphi 0, %s247
      %s250 = sphi 0, %s249
      %s264 = sphi 0, %s250
      %s268 = sphi 0, %s268
      %s270 = sphi 0, %s268
      %s271 = sphi 0, %s270
      %s285 = sphi 0, %s271
      %s289 = sphi 0, %s289
      %s291 = sphi 0, %s289
      %s292 = sphi 0, %s291
      %s306 = sphi 0, %s292
      %s310 = sphi 0, %s310
      %s312 = sphi 0, %s310
      %s313 = sphi 0, %s312
      %s327 = sphi 0, %s313
      %s331 = sphi 0, %s331
      %s333 = sphi 0, %s331
      %s334 = sphi 0, %s333
      %s348 = sphi 0, %s334
      %s352 = sphi 0, %s352
      %s354 = sphi 0, %s352
      %s355 = sphi 0, %s354
      %s369 = sphi 0, %s355
      %s373 = sphi 0, %s373
      %s375 = sphi 0, %s373
      %s376 = sphi 0, %s375
      %s390 = sphi 0, %s376
      %s394 = sphi 0, %s394
      %s396 = sphi 0, %s394
      %s397 = sphi 0, %s396
      %s411 = sphi 0, %s397
      %s415 = sphi 0, %s415
      %s417 = sphi 0, %s415
      %s418 = sphi 0, %s417
      %s432 = sphi 0, %s418
      %s438 = sphi 0, %s440
      %s441 = sphi 0, %s438
      %s442 = sphi 0, %s441
      %s458 = sphi 0, %s442
      %s464 = sphi 0, %s466
      %s467 = sphi 0, %s464
      %s468 = sphi 0, %s467
      %s484 = sphi 0, %s468
    $region4: #{tpu_custom_call.1} parent=1 // loop_header_branch
      %43 = sbr.rel (%p41) target = $region8
    $region5: #{tpu_custom_call.1} parent=1 // loop_body
      %s45 = ssub.s32 %s40, 1
      %s46 = ssub.s32 %s40, 2
      %s47 = sadd.s32 %s40, 1
      %s48 = ssub.s32 %s40, %s47
      %p49 = scmp.eq.s32.totalorder %s48, 0
      %s51 = sadd.s32 %s50, 1
      %s52 = scalar_select %p49, %s50, %s51
      %p55 = pneg %p49
      %p56 = scmp.eq.s32.totalorder %s40, 1
      %p57 = por %p55, %p56
      %p58 = scmp.ne.s32.totalorder %s50, %s53
      %p59 = scmp.eq.s32.totalorder %s40, 0
      %p60 = por %p58, %p59
      %p61 = scmp.ne.s32.totalorder %s50, %s53
      %p62 = scmp.eq.s32.totalorder %s45, 1
      %p63 = por %p61, %p62
      %p64 = scmp.ne.s32.totalorder %s53, %s54
      %p65 = scmp.eq.s32.totalorder %s45, 0
      %p66 = por %p64, %p65
      %p67 = scmp.ne.s32.totalorder %s53, %s54
      %p68 = scmp.eq.s32.totalorder %s46, 1
      %p69 = por %p67, %p68
      %p71 = scmp.ne.s32.totalorder %s54, %s70
      %p72 = scmp.eq.s32.totalorder %s46, 0
      %p73 = por %p71, %p72
      %s74 = ssub.s32 %s40, %s47
      %p75 = scmp.eq.s32.totalorder %s74, 0
      %s77 = sadd.s32 %s76, 1
      %s78 = scalar_select %p75, %s76, %s77
      %p81 = pneg %p75
      %p82 = scmp.eq.s32.totalorder %s40, 1
      %p83 = por %p81, %p82
      %p84 = scmp.ne.s32.totalorder %s76, %s79
      %p85 = scmp.eq.s32.totalorder %s40, 0
      %p86 = por %p84, %p85
      %p87 = scmp.ne.s32.totalorder %s76, %s79
      %p88 = scmp.eq.s32.totalorder %s45, 1
      %p89 = por %p87, %p88
      %p90 = scmp.ne.s32.totalorder %s79, %s80
      %p91 = scmp.eq.s32.totalorder %s45, 0
      %p92 = por %p90, %p91
      %p93 = scmp.ne.s32.totalorder %s79, %s80
      %p94 = scmp.eq.s32.totalorder %s46, 1
      %p95 = por %p93, %p94
      %p97 = scmp.ne.s32.totalorder %s80, %s96
      %p98 = scmp.eq.s32.totalorder %s46, 0
      %p99 = por %p97, %p98
      %s101 = sadd.s32 %s100, 1
      %p104 = scmp.eq.s32.totalorder %s40, 1
      %p105 = scmp.ne.s32.totalorder %s100, %s102
      %p106 = scmp.eq.s32.totalorder %s40, 0
      %p107 = por %p105, %p106
      %p108 = scmp.ne.s32.totalorder %s100, %s102
      %p109 = scmp.eq.s32.totalorder %s45, 1
      %p110 = por %p108, %p109
      %p111 = scmp.ne.s32.totalorder %s102, %s103
      %p112 = scmp.eq.s32.totalorder %s45, 0
      %p113 = por %p111, %p112
      %p114 = scmp.ne.s32.totalorder %s102, %s103
      %p115 = scmp.eq.s32.totalorder %s46, 1
      %p116 = por %p114, %p115
      %p118 = scmp.ne.s32.totalorder %s103, %s117
      %p119 = scmp.eq.s32.totalorder %s46, 0
      %p120 = por %p118, %p119
      %s122 = sadd.s32 %s121, 1
      %p125 = scmp.eq.s32.totalorder %s40, 1
      %p126 = scmp.ne.s32.totalorder %s121, %s123
      %p127 = scmp.eq.s32.totalorder %s40, 0
      %p128 = por %p126, %p127
      %p129 = scmp.ne.s32.totalorder %s121, %s123
      %p130 = scmp.eq.s32.totalorder %s45, 1
      %p131 = por %p129, %p130
      %p132 = scmp.ne.s32.totalorder %s123, %s124
      %p133 = scmp.eq.s32.totalorder %s45, 0
      %p134 = por %p132, %p133
      %p135 = scmp.ne.s32.totalorder %s123, %s124
      %p136 = scmp.eq.s32.totalorder %s46, 1
      %p137 = por %p135, %p136
      %p139 = scmp.ne.s32.totalorder %s124, %s138
      %p140 = scmp.eq.s32.totalorder %s46, 0
      %p141 = por %p139, %p140
      %s143 = sadd.s32 %s142, 1
      %p146 = scmp.eq.s32.totalorder %s40, 1
      %p147 = scmp.ne.s32.totalorder %s142, %s144
      %p148 = scmp.eq.s32.totalorder %s40, 0
      %p149 = por %p147, %p148
      %p150 = scmp.ne.s32.totalorder %s142, %s144
      %p151 = scmp.eq.s32.totalorder %s45, 1
      %p152 = por %p150, %p151
      %p153 = scmp.ne.s32.totalorder %s144, %s145
      %p154 = scmp.eq.s32.totalorder %s45, 0
      %p155 = por %p153, %p154
      %p156 = scmp.ne.s32.totalorder %s144, %s145
      %p157 = scmp.eq.s32.totalorder %s46, 1
      %p158 = por %p156, %p157
      %p160 = scmp.ne.s32.totalorder %s145, %s159
      %p161 = scmp.eq.s32.totalorder %s46, 0
      %p162 = por %p160, %p161
      %s164 = sadd.s32 %s163, 1
      %p167 = scmp.eq.s32.totalorder %s40, 1
      %p168 = scmp.ne.s32.totalorder %s163, %s165
      %p169 = scmp.eq.s32.totalorder %s40, 0
      %p170 = por %p168, %p169
      %p171 = scmp.ne.s32.totalorder %s163, %s165
      %p172 = scmp.eq.s32.totalorder %s45, 1
      %p173 = por %p171, %p172
      %p174 = scmp.ne.s32.totalorder %s165, %s166
      %p175 = scmp.eq.s32.totalorder %s45, 0
      %p176 = por %p174, %p175
      %p177 = scmp.ne.s32.totalorder %s165, %s166
      %p178 = scmp.eq.s32.totalorder %s46, 1
      %p179 = por %p177, %p178
      %p181 = scmp.ne.s32.totalorder %s166, %s180
      %p182 = scmp.eq.s32.totalorder %s46, 0
      %p183 = por %p181, %p182
      %s185 = sadd.s32 %s184, 1
      %p188 = scmp.eq.s32.totalorder %s40, 1
      %p189 = scmp.ne.s32.totalorder %s184, %s186
      %p190 = scmp.eq.s32.totalorder %s40, 0
      %p191 = por %p189, %p190
      %p192 = scmp.ne.s32.totalorder %s184, %s186
      %p193 = scmp.eq.s32.totalorder %s45, 1
      %p194 = por %p192, %p193
      %p195 = scmp.ne.s32.totalorder %s186, %s187
      %p196 = scmp.eq.s32.totalorder %s45, 0
      %p197 = por %p195, %p196
      %p198 = scmp.ne.s32.totalorder %s186, %s187
      %p199 = scmp.eq.s32.totalorder %s46, 1
      %p200 = por %p198, %p199
      %p202 = scmp.ne.s32.totalorder %s187, %s201
      %p203 = scmp.eq.s32.totalorder %s46, 0
      %p204 = por %p202, %p203
      %s206 = sadd.s32 %s205, 1
      %p209 = scmp.eq.s32.totalorder %s40, 1
      %p210 = scmp.ne.s32.totalorder %s205, %s207
      %p211 = scmp.eq.s32.totalorder %s40, 0
      %p212 = por %p210, %p211
      %p213 = scmp.ne.s32.totalorder %s205, %s207
      %p214 = scmp.eq.s32.totalorder %s45, 1
      %p215 = por %p213, %p214
      %p216 = scmp.ne.s32.totalorder %s207, %s208
      %p217 = scmp.eq.s32.totalorder %s45, 0
      %p218 = por %p216, %p217
      %p219 = scmp.ne.s32.totalorder %s207, %s208
      %p220 = scmp.eq.s32.totalorder %s46, 1
      %p221 = por %p219, %p220
      %p223 = scmp.ne.s32.totalorder %s208, %s222
      %p224 = scmp.eq.s32.totalorder %s46, 0
      %p225 = por %p223, %p224
      %s227 = sadd.s32 %s226, 1
      %p230 = scmp.eq.s32.totalorder %s40, 1
      %p231 = scmp.ne.s32.totalorder %s226, %s228
      %p232 = scmp.eq.s32.totalorder %s40, 0
      %p233 = por %p231, %p232
      %p234 = scmp.ne.s32.totalorder %s226, %s228
      %p235 = scmp.eq.s32.totalorder %s45, 1
      %p236 = por %p234, %p235
      %p237 = scmp.ne.s32.totalorder %s228, %s229
      %p238 = scmp.eq.s32.totalorder %s45, 0
      %p239 = por %p237, %p238
      %p240 = scmp.ne.s32.totalorder %s228, %s229
      %p241 = scmp.eq.s32.totalorder %s46, 1
      %p242 = por %p240, %p241
      %p244 = scmp.ne.s32.totalorder %s229, %s243
      %p245 = scmp.eq.s32.totalorder %s46, 0
      %p246 = por %p244, %p245
      %s248 = sadd.s32 %s247, 1
      %p251 = scmp.eq.s32.totalorder %s40, 1
      %p252 = scmp.ne.s32.totalorder %s247, %s249
      %p253 = scmp.eq.s32.totalorder %s40, 0
      %p254 = por %p252, %p253
      %p255 = scmp.ne.s32.totalorder %s247, %s249
      %p256 = scmp.eq.s32.totalorder %s45, 1
      %p257 = por %p255, %p256
      %p258 = scmp.ne.s32.totalorder %s249, %s250
      %p259 = scmp.eq.s32.totalorder %s45, 0
      %p260 = por %p258, %p259
      %p261 = scmp.ne.s32.totalorder %s249, %s250
      %p262 = scmp.eq.s32.totalorder %s46, 1
      %p263 = por %p261, %p262
      %p265 = scmp.ne.s32.totalorder %s250, %s264
      %p266 = scmp.eq.s32.totalorder %s46, 0
      %p267 = por %p265, %p266
      %s269 = sadd.s32 %s268, 1
      %p272 = scmp.eq.s32.totalorder %s40, 1
      %p273 = scmp.ne.s32.totalorder %s268, %s270
      %p274 = scmp.eq.s32.totalorder %s40, 0
      %p275 = por %p273, %p274
      %p276 = scmp.ne.s32.totalorder %s268, %s270
      %p277 = scmp.eq.s32.totalorder %s45, 1
      %p278 = por %p276, %p277
      %p279 = scmp.ne.s32.totalorder %s270, %s271
      %p280 = scmp.eq.s32.totalorder %s45, 0
      %p281 = por %p279, %p280
      %p282 = scmp.ne.s32.totalorder %s270, %s271
      %p283 = scmp.eq.s32.totalorder %s46, 1
      %p284 = por %p282, %p283
      %p286 = scmp.ne.s32.totalorder %s271, %s285
      %p287 = scmp.eq.s32.totalorder %s46, 0
      %p288 = por %p286, %p287
      %s290 = sadd.s32 %s289, 1
      %p293 = scmp.eq.s32.totalorder %s40, 1
      %p294 = scmp.ne.s32.totalorder %s289, %s291
      %p295 = scmp.eq.s32.totalorder %s40, 0
      %p296 = por %p294, %p295
      %p297 = scmp.ne.s32.totalorder %s289, %s291
      %p298 = scmp.eq.s32.totalorder %s45, 1
      %p299 = por %p297, %p298
      %p300 = scmp.ne.s32.totalorder %s291, %s292
      %p301 = scmp.eq.s32.totalorder %s45, 0
      %p302 = por %p300, %p301
      %p303 = scmp.ne.s32.totalorder %s291, %s292
      %p304 = scmp.eq.s32.totalorder %s46, 1
      %p305 = por %p303, %p304
      %p307 = scmp.ne.s32.totalorder %s292, %s306
      %p308 = scmp.eq.s32.totalorder %s46, 0
      %p309 = por %p307, %p308
      %s311 = sadd.s32 %s310, 1
      %p314 = scmp.eq.s32.totalorder %s40, 1
      %p315 = scmp.ne.s32.totalorder %s310, %s312
      %p316 = scmp.eq.s32.totalorder %s40, 0
      %p317 = por %p315, %p316
      %p318 = scmp.ne.s32.totalorder %s310, %s312
      %p319 = scmp.eq.s32.totalorder %s45, 1
      %p320 = por %p318, %p319
      %p321 = scmp.ne.s32.totalorder %s312, %s313
      %p322 = scmp.eq.s32.totalorder %s45, 0
      %p323 = por %p321, %p322
      %p324 = scmp.ne.s32.totalorder %s312, %s313
      %p325 = scmp.eq.s32.totalorder %s46, 1
      %p326 = por %p324, %p325
      %p328 = scmp.ne.s32.totalorder %s313, %s327
      %p329 = scmp.eq.s32.totalorder %s46, 0
      %p330 = por %p328, %p329
      %s332 = sadd.s32 %s331, 1
      %p335 = scmp.eq.s32.totalorder %s40, 1
      %p336 = scmp.ne.s32.totalorder %s331, %s333
      %p337 = scmp.eq.s32.totalorder %s40, 0
      %p338 = por %p336, %p337
      %p339 = scmp.ne.s32.totalorder %s331, %s333
      %p340 = scmp.eq.s32.totalorder %s45, 1
      %p341 = por %p339, %p340
      %p342 = scmp.ne.s32.totalorder %s333, %s334
      %p343 = scmp.eq.s32.totalorder %s45, 0
      %p344 = por %p342, %p343
      %p345 = scmp.ne.s32.totalorder %s333, %s334
      %p346 = scmp.eq.s32.totalorder %s46, 1
      %p347 = por %p345, %p346
      %p349 = scmp.ne.s32.totalorder %s334, %s348
      %p350 = scmp.eq.s32.totalorder %s46, 0
      %p351 = por %p349, %p350
      %s353 = sadd.s32 %s352, 1
      %p356 = scmp.eq.s32.totalorder %s40, 1
      %p357 = scmp.ne.s32.totalorder %s352, %s354
      %p358 = scmp.eq.s32.totalorder %s40, 0
      %p359 = por %p357, %p358
      %p360 = scmp.ne.s32.totalorder %s352, %s354
      %p361 = scmp.eq.s32.totalorder %s45, 1
      %p362 = por %p360, %p361
      %p363 = scmp.ne.s32.totalorder %s354, %s355
      %p364 = scmp.eq.s32.totalorder %s45, 0
      %p365 = por %p363, %p364
      %p366 = scmp.ne.s32.totalorder %s354, %s355
      %p367 = scmp.eq.s32.totalorder %s46, 1
      %p368 = por %p366, %p367
      %p370 = scmp.ne.s32.totalorder %s355, %s369
      %p371 = scmp.eq.s32.totalorder %s46, 0
      %p372 = por %p370, %p371
      %s374 = sadd.s32 %s373, 1
      %p377 = scmp.eq.s32.totalorder %s40, 1
      %p378 = scmp.ne.s32.totalorder %s373, %s375
      %p379 = scmp.eq.s32.totalorder %s40, 0
      %p380 = por %p378, %p379
      %p381 = scmp.ne.s32.totalorder %s373, %s375
      %p382 = scmp.eq.s32.totalorder %s45, 1
      %p383 = por %p381, %p382
      %p384 = scmp.ne.s32.totalorder %s375, %s376
      %p385 = scmp.eq.s32.totalorder %s45, 0
      %p386 = por %p384, %p385
      %p387 = scmp.ne.s32.totalorder %s375, %s376
      %p388 = scmp.eq.s32.totalorder %s46, 1
      %p389 = por %p387, %p388
      %p391 = scmp.ne.s32.totalorder %s376, %s390
      %p392 = scmp.eq.s32.totalorder %s46, 0
      %p393 = por %p391, %p392
      %s395 = sadd.s32 %s394, 1
      %p398 = scmp.eq.s32.totalorder %s40, 1
      %p399 = scmp.ne.s32.totalorder %s394, %s396
      %p400 = scmp.eq.s32.totalorder %s40, 0
      %p401 = por %p399, %p400
      %p402 = scmp.ne.s32.totalorder %s394, %s396
      %p403 = scmp.eq.s32.totalorder %s45, 1
      %p404 = por %p402, %p403
      %p405 = scmp.ne.s32.totalorder %s396, %s397
      %p406 = scmp.eq.s32.totalorder %s45, 0
      %p407 = por %p405, %p406
      %p408 = scmp.ne.s32.totalorder %s396, %s397
      %p409 = scmp.eq.s32.totalorder %s46, 1
      %p410 = por %p408, %p409
      %p412 = scmp.ne.s32.totalorder %s397, %s411
      %p413 = scmp.eq.s32.totalorder %s46, 0
      %p414 = por %p412, %p413
      %s416 = sadd.s32 %s415, 1
      %p419 = scmp.eq.s32.totalorder %s40, 1
      %p420 = scmp.ne.s32.totalorder %s415, %s417
      %p421 = scmp.eq.s32.totalorder %s40, 0
      %p422 = por %p420, %p421
      %p423 = scmp.ne.s32.totalorder %s415, %s417
      %p424 = scmp.eq.s32.totalorder %s45, 1
      %p425 = por %p423, %p424
      %p426 = scmp.ne.s32.totalorder %s417, %s418
      %p427 = scmp.eq.s32.totalorder %s45, 0
      %p428 = por %p426, %p427
      %p429 = scmp.ne.s32.totalorder %s417, %s418
      %p430 = scmp.eq.s32.totalorder %s46, 1
      %p431 = por %p429, %p430
      %p433 = scmp.ne.s32.totalorder %s418, %s432
      %p434 = scmp.eq.s32.totalorder %s46, 0
      %p435 = por %p433, %p434
      %s436 = ssub.s32 %s40, %s47
      %p437 = scmp.eq.s32.totalorder %s436, 0
      %s439 = sadd.s32 %s438, 1
      %s440 = scalar_select %p437, %s438, %s439
      %p443 = pneg %p437
      %p444 = scmp.eq.s32.totalorder %s40, 1
      %p445 = por %p443, %p444
      %p446 = scmp.ne.s32.totalorder %s438, %s441
      %p447 = scmp.eq.s32.totalorder %s40, 0
      %p448 = por %p446, %p447
      %p449 = scmp.ne.s32.totalorder %s438, %s441
      %p450 = scmp.eq.s32.totalorder %s45, 1
      %p451 = por %p449, %p450
      %p452 = scmp.ne.s32.totalorder %s441, %s442
      %p453 = scmp.eq.s32.totalorder %s45, 0
      %p454 = por %p452, %p453
      %p455 = scmp.ne.s32.totalorder %s441, %s442
      %p456 = scmp.eq.s32.totalorder %s46, 1
      %p457 = por %p455, %p456
      %p459 = scmp.ne.s32.totalorder %s442, %s458
      %p460 = scmp.eq.s32.totalorder %s46, 0
      %p461 = por %p459, %p460
      %s462 = ssub.s32 %s40, %s47
      %p463 = scmp.eq.s32.totalorder %s462, 0
      %s465 = sadd.s32 %s464, 1
      %s466 = scalar_select %p463, %s464, %s465
      %p469 = pneg %p463
      %p470 = scmp.eq.s32.totalorder %s40, 1
      %p471 = por %p469, %p470
      %p472 = scmp.ne.s32.totalorder %s464, %s467
      %p473 = scmp.eq.s32.totalorder %s40, 0
      %p474 = por %p472, %p473
      %p475 = scmp.ne.s32.totalorder %s464, %s467
      %p476 = scmp.eq.s32.totalorder %s45, 1
      %p477 = por %p475, %p476
      %p478 = scmp.ne.s32.totalorder %s467, %s468
      %p479 = scmp.eq.s32.totalorder %s45, 0
      %p480 = por %p478, %p479
      %p481 = scmp.ne.s32.totalorder %s467, %s468
      %p482 = scmp.eq.s32.totalorder %s46, 1
      %p483 = por %p481, %p482
      %p485 = scmp.ne.s32.totalorder %s468, %s484
      %p486 = scmp.eq.s32.totalorder %s46, 0
      %p487 = por %p485, %p486
      %p488 = scmp.le.s32.totalorder 1, %s40
      %p489 = scmp.lt.s32.totalorder %s40, 3
      %p490 = pnand %p488, %p489
      %p491 = pneg %p490
      // Predicated region
      $region9: #{tpu_custom_call.1} parent=5 // pred_check
        _
      $region10: #{tpu_custom_call.1} parent=5 // pred_check_branch
        %493 = sbr.rel (%p490) target = $region12
      $region11: #{tpu_custom_call.1} parent=5 // pred_region
        %s494 = ssub.s32 %s40, 1
        // Predicated region
        $region13: #{tpu_custom_call.1} parent=11 // pred_check
          %p495 = pneg %p113
        $region14: #{tpu_custom_call.1} parent=11 // pred_check_branch
          %497 = sbr.rel (%p495) target = $region16
        $region15: #{tpu_custom_call.1} parent=11 // pred_region
          %s499 = ssub.s32 4096, 4096
          %500 = vsyncadd [#allocation6], %s499
          %s501 = sshll.u32 [#allocation7], 4
          %s502 = int_to_ptr.vmem [resolvable:$true] %s501
          %507 = dma.hbm_to_vmem [thread:$0]  %s2, 4096, %s502, [#allocation6], 128, 128, 8
        $region16: #{tpu_custom_call.1} parent=11 // pred_fallthru
          _
        // Predicated region
        $region17: #{tpu_custom_call.1} parent=11 // pred_check
          %p508 = pneg %p134
        $region18: #{tpu_custom_call.1} parent=11 // pred_check_branch
          %510 = sbr.rel (%p508) target = $region20
        $region19: #{tpu_custom_call.1} parent=11 // pred_region
          _
        $region20: #{tpu_custom_call.1} parent=11 // pred_fallthru
          _
        // Predicated region
        $region21: #{tpu_custom_call.1} parent=11 // pred_check
          %p511 = pneg %p155
        $region22: #{tpu_custom_call.1} parent=11 // pred_check_branch
          %513 = sbr.rel (%p511) target = $region24
        $region23: #{tpu_custom_call.1} parent=11 // pred_region
          _
        $region24: #{tpu_custom_call.1} parent=11 // pred_fallthru
          _
        // Predicated region
        $region25: #{tpu_custom_call.1} parent=11 // pred_check
          %p514 = pneg %p176
        $region26: #{tpu_custom_call.1} parent=11 // pred_check_branch
          %516 = sbr.rel (%p514) target = $region28
        $region27: #{tpu_custom_call.1} parent=11 // pred_region
          _
        $region28: #{tpu_custom_call.1} parent=11 // pred_fallthru
          _
        // Predicated region
        $region29: #{tpu_custom_call.1} parent=11 // pred_check
          %p517 = pneg %p197
        $region30: #{tpu_custom_call.1} parent=11 // pred_check_branch
          %519 = sbr.rel (%p517) target = $region32
        $region31: #{tpu_custom_call.1} parent=11 // pred_region
          _
        $region32: #{tpu_custom_call.1} parent=11 // pred_fallthru
          _
        // Predicated region
        $region33: #{tpu_custom_call.1} parent=11 // pred_check
          %p520 = pneg %p218
        $region34: #{tpu_custom_call.1} parent=11 // pred_check_branch
          %522 = sbr.rel (%p520) target = $region36
        $region35: #{tpu_custom_call.1} parent=11 // pred_region
          _
        $region36: #{tpu_custom_call.1} parent=11 // pred_fallthru
          _
        // Predicated region
        $region37: #{tpu_custom_call.1} parent=11 // pred_check
          %p523 = pneg %p239
        $region38: #{tpu_custom_call.1} parent=11 // pred_check_branch
          %525 = sbr.rel (%p523) target = $region40
        $region39: #{tpu_custom_call.1} parent=11 // pred_region
          _
        $region40: #{tpu_custom_call.1} parent=11 // pred_fallthru
          _
        // Predicated region
        $region41: #{tpu_custom_call.1} parent=11 // pred_check
          %p526 = pneg %p260
        $region42: #{tpu_custom_call.1} parent=11 // pred_check_branch
          %528 = sbr.rel (%p526) target = $region44
        $region43: #{tpu_custom_call.1} parent=11 // pred_region
          _
        $region44: #{tpu_custom_call.1} parent=11 // pred_fallthru
          _
        // Predicated region
        $region45: #{tpu_custom_call.1} parent=11 // pred_check
          %p529 = pneg %p281
        $region46: #{tpu_custom_call.1} parent=11 // pred_check_branch
          %531 = sbr.rel (%p529) target = $region48
        $region47: #{tpu_custom_call.1} parent=11 // pred_region
          _
        $region48: #{tpu_custom_call.1} parent=11 // pred_fallthru
          _
        // Predicated region
        $region49: #{tpu_custom_call.1} parent=11 // pred_check
          %p532 = pneg %p302
        $region50: #{tpu_custom_call.1} parent=11 // pred_check_branch
          %534 = sbr.rel (%p532) target = $region52
        $region51: #{tpu_custom_call.1} parent=11 // pred_region
          _
        $region52: #{tpu_custom_call.1} parent=11 // pred_fallthru
          _
        // Predicated region
        $region53: #{tpu_custom_call.1} parent=11 // pred_check
          %p535 = pneg %p323
        $region54: #{tpu_custom_call.1} parent=11 // pred_check_branch
          %537 = sbr.rel (%p535) target = $region56
        $region55: #{tpu_custom_call.1} parent=11 // pred_region
          %s539 = ssub.s32 512, 512
          %540 = vsyncadd [#allocation9], %s539
          %s541 = sshll.u32 [#allocation8], 4
          %s542 = int_to_ptr.vmem [resolvable:$true] %s541
          %547 = dma.hbm_to_vmem [thread:$0]  %s12, 512, %s542, [#allocation9], 64, 64, 4
        $region56: #{tpu_custom_call.1} parent=11 // pred_fallthru
          _
        // Predicated region
        $region57: #{tpu_custom_call.1} parent=11 // pred_check
          %p548 = pneg %p344
        $region58: #{tpu_custom_call.1} parent=11 // pred_check_branch
          %550 = sbr.rel (%p548) target = $region60
        $region59: #{tpu_custom_call.1} parent=11 // pred_region
          _
        $region60: #{tpu_custom_call.1} parent=11 // pred_fallthru
          _
        // Predicated region
        $region61: #{tpu_custom_call.1} parent=11 // pred_check
          %p551 = pneg %p365
        $region62: #{tpu_custom_call.1} parent=11 // pred_check_branch
          %553 = sbr.rel (%p551) target = $region64
        $region63: #{tpu_custom_call.1} parent=11 // pred_region
          %s555 = ssub.s32 2048, 2048
          %556 = vsyncadd [#allocation9], %s555
          %s557 = sshll.u32 [#allocation10], 4
          %s558 = int_to_ptr.vmem [resolvable:$true] %s557
          %563 = dma.hbm_to_vmem [thread:$0]  %s14, 2048, %s558, [#allocation9], 128, 128, 8
        $region64: #{tpu_custom_call.1} parent=11 // pred_fallthru
          _
        // Predicated region
        $region65: #{tpu_custom_call.1} parent=11 // pred_check
          %p564 = pneg %p386
        $region66: #{tpu_custom_call.1} parent=11 // pred_check_branch
          %566 = sbr.rel (%p564) target = $region68
        $region67: #{tpu_custom_call.1} parent=11 // pred_region
          _
        $region68: #{tpu_custom_call.1} parent=11 // pred_fallthru
          _
        // Predicated region
        $region69: #{tpu_custom_call.1} parent=11 // pred_check
          %p567 = pneg %p407
        $region70: #{tpu_custom_call.1} parent=11 // pred_check_branch
          %569 = sbr.rel (%p567) target = $region72
        $region71: #{tpu_custom_call.1} parent=11 // pred_region
          %s571 = ssub.s32 4096, 4096
          %572 = vsyncadd [#allocation12], %s571
          %s573 = sshll.u32 [#allocation11], 4
          %s574 = int_to_ptr.vmem [resolvable:$true] %s573
          %579 = dma.hbm_to_vmem [thread:$0]  %s16, 4096, %s574, [#allocation12], 128, 128, 8
        $region72: #{tpu_custom_call.1} parent=11 // pred_fallthru
          _
        // Predicated region
        $region73: #{tpu_custom_call.1} parent=11 // pred_check
          %p580 = pneg %p428
        $region74: #{tpu_custom_call.1} parent=11 // pred_check_branch
          %582 = sbr.rel (%p580) target = $region76
        $region75: #{tpu_custom_call.1} parent=11 // pred_region
          _
        $region76: #{tpu_custom_call.1} parent=11 // pred_fallthru
          _
      $region12: #{tpu_custom_call.1} parent=5 // pred_fallthru
        _
      %p583 = scmp.lt.s32.totalorder %s40, 2
      // Predicated region
      $region77: #{tpu_custom_call.1} parent=5 // pred_check
        %p584 = pneg %p583
      $region78: #{tpu_custom_call.1} parent=5 // pred_check_branch
        %586 = sbr.rel (%p584) target = $region80
      $region79: #{tpu_custom_call.1} parent=5 // pred_region
        // Predicated region
        $region81: #{tpu_custom_call.1} parent=79 // pred_check
          %p587 = pneg %p60
        $region82: #{tpu_custom_call.1} parent=79 // pred_check_branch
          %589 = sbr.rel (%p587) target = $region84
        $region83: #{tpu_custom_call.1} parent=79 // pred_region
          %s590 = sand.u32 %s50, 1
          %s591 = scalar_lea.sflag [#allocation3], %s590
          %s592 = sand.u32 %s50, 1
          %s593 = smul.addr %s592, 16
          %s594 = scalar_lea.vmem [#allocation2], %s593
          %s596 = ssub.s32 256, 256
          %597 = vsyncadd %s591, %s596
          %s598 = smul.addr %s40, 2
          %s599 = smul.addr %s598, 128
          %s600 = scalar_lea.hbm %s0, %s599
          %s602 = sshll.u32 %s594, 4
          %s603 = int_to_ptr.vmem [resolvable:$true] %s602
          %605 = dma.hbm_to_vmem [thread:$0]  %s600, 256, %s603, %s591
        $region84: #{tpu_custom_call.1} parent=79 // pred_fallthru
          _
        // Predicated region
        $region85: #{tpu_custom_call.1} parent=79 // pred_check
          %p606 = pneg %p86
        $region86: #{tpu_custom_call.1} parent=79 // pred_check_branch
          %608 = sbr.rel (%p606) target = $region88
        $region87: #{tpu_custom_call.1} parent=79 // pred_region
          %s609 = sand.u32 %s40, 1
          %s610 = scalar_lea.sflag [#allocation6], %s609
          %s611 = sand.u32 %s76, 1
          %s612 = smul.addr %s611, 8
          %s613 = scalar_lea.vmem [#allocation5], %s612
          %s615 = ssub.s32 128, 128
          %616 = vsyncadd %s610, %s615
          %s617 = smul.addr %s40, 128
          %s618 = scalar_lea.hbm %s1, %s617
          %s620 = sshll.u32 %s613, 4
          %s621 = int_to_ptr.vmem [resolvable:$true] %s620
          %623 = dma.hbm_to_vmem [thread:$0]  %s618, 128, %s621, %s610
        $region88: #{tpu_custom_call.1} parent=79 // pred_fallthru
          _
      $region80: #{tpu_custom_call.1} parent=5 // pred_fallthru
        _
      %p624 = scmp.le.s32.totalorder 1, %s40
      %p625 = scmp.lt.s32.totalorder %s40, 3
      %p626 = pnand %p624, %p625
      %p627 = pneg %p626
      // Predicated region
      $region89: #{tpu_custom_call.1} parent=5 // pred_check
        _
      $region90: #{tpu_custom_call.1} parent=5 // pred_check_branch
        %629 = sbr.rel (%p626) target = $region92
      $region91: #{tpu_custom_call.1} parent=5 // pred_region
        %s630 = ssub.s32 %s40, 1
        %s631 = sand.u32 %s53, 1
        %s632 = scalar_lea.sflag [#allocation3], %s631
        %s633 = sand.u32 %s53, 1
        %s634 = smul.addr %s633, 16
        %s635 = scalar_lea.vmem [#allocation2], %s634
        // Predicated region
        $region93: #{tpu_custom_call.1} parent=91 // pred_check
          %p636 = pneg %p66
        $region94: #{tpu_custom_call.1} parent=91 // pred_check_branch
          %638 = sbr.rel (%p636) target = $region96
        $region95: #{tpu_custom_call.1} parent=91 // pred_region
          %639 = dma.done %s632, 256
        $region96: #{tpu_custom_call.1} parent=91 // pred_fallthru
          _
        %s640 = sand.u32 %s45, 1
        %s641 = scalar_lea.sflag [#allocation6], %s640
        %s642 = sand.u32 %s79, 1
        %s643 = smul.addr %s642, 8
        %s644 = scalar_lea.vmem [#allocation5], %s643
        // Predicated region
        $region97: #{tpu_custom_call.1} parent=91 // pred_check
          %p645 = pneg %p92
        $region98: #{tpu_custom_call.1} parent=91 // pred_check_branch
          %647 = sbr.rel (%p645) target = $region100
        $region99: #{tpu_custom_call.1} parent=91 // pred_region
          %648 = dma.done %s641, 128
        $region100: #{tpu_custom_call.1} parent=91 // pred_fallthru
          _
        // Predicated region
        $region101: #{tpu_custom_call.1} parent=91 // pred_check
          %p649 = pneg %p113
        $region102: #{tpu_custom_call.1} parent=91 // pred_check_branch
          %651 = sbr.rel (%p649) target = $region104
        $region103: #{tpu_custom_call.1} parent=91 // pred_region
          %652 = dma.done [#allocation6], 4096
        $region104: #{tpu_custom_call.1} parent=91 // pred_fallthru
          _
        // Predicated region
        $region105: #{tpu_custom_call.1} parent=91 // pred_check
          %p653 = pneg %p323
        $region106: #{tpu_custom_call.1} parent=91 // pred_check_branch
          %655 = sbr.rel (%p653) target = $region108
        $region107: #{tpu_custom_call.1} parent=91 // pred_region
          %656 = dma.done [#allocation9], 512
        $region108: #{tpu_custom_call.1} parent=91 // pred_fallthru
          _
        // Predicated region
        $region109: #{tpu_custom_call.1} parent=91 // pred_check
          %p657 = pneg %p365
        $region110: #{tpu_custom_call.1} parent=91 // pred_check_branch
          %659 = sbr.rel (%p657) target = $region112
        $region111: #{tpu_custom_call.1} parent=91 // pred_region
          %660 = dma.done [#allocation9], 2048
        $region112: #{tpu_custom_call.1} parent=91 // pred_fallthru
          _
        // Predicated region
        $region113: #{tpu_custom_call.1} parent=91 // pred_check
          %p661 = pneg %p407
        $region114: #{tpu_custom_call.1} parent=91 // pred_check_branch
          %663 = sbr.rel (%p661) target = $region116
        $region115: #{tpu_custom_call.1} parent=91 // pred_region
          %664 = dma.done [#allocation12], 4096
        $region116: #{tpu_custom_call.1} parent=91 // pred_fallthru
          _
        %s665 = sand.u32 %s53, 1
        %s666 = scalar_lea.sflag [#allocation3], %s665
        %s667 = sand.u32 %s53, 1
        %s668 = smul.addr %s667, 16
        %s669 = scalar_lea.vmem [#allocation2], %s668
        %p670 = pneg %p66
        %p671 = pneg %p63
        %s672 = sand.u32 %s45, 1
        %s673 = scalar_lea.sflag [#allocation6], %s672
        %s674 = sand.u32 %s79, 1
        %s675 = smul.addr %s674, 8
        %s676 = scalar_lea.vmem [#allocation5], %s675
        %p677 = pneg %p92
        %p678 = pneg %p89
        %p679 = pneg %p113
        %p680 = pneg %p110
        %p681 = pneg %p134
        %p682 = pneg %p131
        %p683 = pneg %p155
        %p684 = pneg %p152
        %p685 = pneg %p176
        %p686 = pneg %p173
        %p687 = pneg %p197
        %p688 = pneg %p194
        %p689 = pneg %p218
        %p690 = pneg %p215
        %p691 = pneg %p239
        %p692 = pneg %p236
        %p693 = pneg %p260
        %p694 = pneg %p257
        %p695 = pneg %p281
        %p696 = pneg %p278
        %p697 = pneg %p302
        %p698 = pneg %p299
        %p699 = pneg %p323
        %p700 = pneg %p320
        %p701 = pneg %p344
        %p702 = pneg %p341
        %p703 = pneg %p365
        %p704 = pneg %p362
        %p705 = pneg %p386
        %p706 = pneg %p383
        %p707 = pneg %p407
        %p708 = pneg %p404
        %p709 = pneg %p428
        %p710 = pneg %p425
        %p711 = pneg %p454
        %p712 = pneg %p451
        %s713 = sand.u32 %s441, 1
        %s714 = scalar_lea.sflag [#allocation4], %s713
        %s715 = sand.u32 %s441, 1
        %s716 = smul.addr %s715, 8
        %s717 = scalar_lea.vmem [#allocation13], %s716
        %p718 = pneg %p480
        %p719 = pneg %p477
        %s720 = sand.u32 %s467, 1
        %s721 = scalar_lea.sflag [#allocation15], %s720
        %s722 = sand.u32 %s467, 1
        %s723 = smul.addr %s722, 16
        %s724 = scalar_lea.vmem [#allocation14], %s723
        %v726 = vld [vmem:[%s635] sm:$0xff]
        %v727 = vld [vmem:[%s635 + $0x8] sm:$0xff]
        %v728 = vpack.c.bf16 %v726, %v726
        %v729 = vpack.c.bf16 %v727, %v727
        %v730 = vld [vmem:[#allocation7] sm:$0xff]
        %v731 = vld [vmem:[#allocation7 + $0x8] sm:$0xff]
        %v732 = vld [vmem:[#allocation7 + $0x10] sm:$0xff]
        %v733 = vld [vmem:[#allocation7 + $0x18] sm:$0xff]
        %v734 = vld [vmem:[#allocation7 + $0x20] sm:$0xff]
        %v735 = vld [vmem:[#allocation7 + $0x28] sm:$0xff]
        %v736 = vld [vmem:[#allocation7 + $0x30] sm:$0xff]
        %v737 = vld [vmem:[#allocation7 + $0x38] sm:$0xff]
        %v738 = vld [vmem:[#allocation7 + $0x40] sm:$0xff]
        %v739 = vld [vmem:[#allocation7 + $0x48] sm:$0xff]
        %v740 = vld [vmem:[#allocation7 + $0x50] sm:$0xff]
        %v741 = vld [vmem:[#allocation7 + $0x58] sm:$0xff]
        %v742 = vld [vmem:[#allocation7 + $0x60] sm:$0xff]
        %v743 = vld [vmem:[#allocation7 + $0x68] sm:$0xff]
        %v744 = vld [vmem:[#allocation7 + $0x70] sm:$0xff]
        %v745 = vld [vmem:[#allocation7 + $0x78] sm:$0xff]
        %v746 = vld [vmem:[#allocation7 + $0x80] sm:$0xff]
        %v747 = vld [vmem:[#allocation7 + $0x88] sm:$0xff]
        %v748 = vld [vmem:[#allocation7 + $0x90] sm:$0xff]
        %v749 = vld [vmem:[#allocation7 + $0x98] sm:$0xff]
        %v750 = vld [vmem:[#allocation7 + $0xa0] sm:$0xff]
        %v751 = vld [vmem:[#allocation7 + $0xa8] sm:$0xff]
        %v752 = vld [vmem:[#allocation7 + $0xb0] sm:$0xff]
        %v753 = vld [vmem:[#allocation7 + $0xb8] sm:$0xff]
        %v754 = vld [vmem:[#allocation7 + $0xc0] sm:$0xff]
        %v755 = vld [vmem:[#allocation7 + $0xc8] sm:$0xff]
        %v756 = vld [vmem:[#allocation7 + $0xd0] sm:$0xff]
        %v757 = vld [vmem:[#allocation7 + $0xd8] sm:$0xff]
        %v758 = vld [vmem:[#allocation7 + $0xe0] sm:$0xff]
        %v759 = vld [vmem:[#allocation7 + $0xe8] sm:$0xff]
        %v760 = vld [vmem:[#allocation7 + $0xf0] sm:$0xff]
        %v761 = vld [vmem:[#allocation7 + $0xf8] sm:$0xff]
        %v762 = vld [vmem:[%s3] sm:$0x3]
        %v764 = vlaneseq
        %v765 = vshrl.u32 %v764, 7
        %v766 = vsub.s32 0, %v765
        %v767 = vrot.slane %v762, %v766
        %v768 = vlaneseq
        %v769 = vshrl.u32 %v768, 7
        %v770 = vsub.s32 1, %v769
        %v771 = vrot.slane %v762, %v770
        %v806 = vunpack.c.l.b16 %v730
        %v807 = vunpack.c.h.b16 %v730
        %v808 = vunpack.c.l.b16 %v731
        %v809 = vunpack.c.h.b16 %v731
        %v810 = vunpack.c.l.b16 %v732
        %v811 = vunpack.c.h.b16 %v732
        %v812 = vunpack.c.l.b16 %v733
        %v813 = vunpack.c.h.b16 %v733
        %v814 = vunpack.c.l.b16 %v734
        %v815 = vunpack.c.h.b16 %v734
        %v816 = vunpack.c.l.b16 %v735
        %v817 = vunpack.c.h.b16 %v735
        %v818 = vunpack.c.l.b16 %v736
        %v819 = vunpack.c.h.b16 %v736
        %v820 = vunpack.c.l.b16 %v737
        %v821 = vunpack.c.h.b16 %v737
        %v822 = vunpack.c.l.b16 %v738
        %v823 = vunpack.c.h.b16 %v738
        %v824 = vunpack.c.l.b16 %v739
        %v825 = vunpack.c.h.b16 %v739
        %v826 = vunpack.c.l.b16 %v740
        %v827 = vunpack.c.h.b16 %v740
        %v828 = vunpack.c.l.b16 %v741
        %v829 = vunpack.c.h.b16 %v741
        %v830 = vunpack.c.l.b16 %v742
        %v831 = vunpack.c.h.b16 %v742
        %v832 = vunpack.c.l.b16 %v743
        %v833 = vunpack.c.h.b16 %v743
        %v834 = vunpack.c.l.b16 %v744
        %v835 = vunpack.c.h.b16 %v744
        %v836 = vunpack.c.l.b16 %v745
        %v837 = vunpack.c.h.b16 %v745
        %v838 = vunpack.c.l.b16 %v746
        %v839 = vunpack.c.h.b16 %v746
        %v840 = vunpack.c.l.b16 %v747
        %v841 = vunpack.c.h.b16 %v747
        %v842 = vunpack.c.l.b16 %v748
        %v843 = vunpack.c.h.b16 %v748
        %v844 = vunpack.c.l.b16 %v749
        %v845 = vunpack.c.h.b16 %v749
        %v846 = vunpack.c.l.b16 %v750
        %v847 = vunpack.c.h.b16 %v750
        %v848 = vunpack.c.l.b16 %v751
        %v849 = vunpack.c.h.b16 %v751
        %v850 = vunpack.c.l.b16 %v752
        %v851 = vunpack.c.h.b16 %v752
        %v852 = vunpack.c.l.b16 %v753
        %v853 = vunpack.c.h.b16 %v753
        %v854 = vunpack.c.l.b16 %v754
        %v855 = vunpack.c.h.b16 %v754
        %v856 = vunpack.c.l.b16 %v755
        %v857 = vunpack.c.h.b16 %v755
        %v858 = vunpack.c.l.b16 %v756
        %v859 = vunpack.c.h.b16 %v756
        %v860 = vunpack.c.l.b16 %v757
        %v861 = vunpack.c.h.b16 %v757
        %v862 = vunpack.c.l.b16 %v758
        %v863 = vunpack.c.h.b16 %v758
        %v864 = vunpack.c.l.b16 %v759
        %v865 = vunpack.c.h.b16 %v759
        %v866 = vunpack.c.l.b16 %v760
        %v867 = vunpack.c.h.b16 %v760
        %v868 = vunpack.c.l.b16 %v761
        %v869 = vunpack.c.h.b16 %v761
        %v870 = vpack.c.b16 %v808, %v806
        %v871 = vpack.c.b16 %v809, %v807
        %v872 = vpack.c.b16 %v812, %v810
        %v873 = vpack.c.b16 %v813, %v811
        %v874 = vpack.c.b16 %v816, %v814
        %v875 = vpack.c.b16 %v817, %v815
        %v876 = vpack.c.b16 %v820, %v818
        %v877 = vpack.c.b16 %v821, %v819
        %v878 = vpack.c.b16 %v824, %v822
        %v879 = vpack.c.b16 %v825, %v823
        %v880 = vpack.c.b16 %v828, %v826
        %v881 = vpack.c.b16 %v829, %v827
        %v882 = vpack.c.b16 %v832, %v830
        %v883 = vpack.c.b16 %v833, %v831
        %v884 = vpack.c.b16 %v836, %v834
        %v885 = vpack.c.b16 %v837, %v835
        %v886 = vpack.c.b16 %v840, %v838
        %v887 = vpack.c.b16 %v841, %v839
        %v888 = vpack.c.b16 %v844, %v842
        %v889 = vpack.c.b16 %v845, %v843
        %v890 = vpack.c.b16 %v848, %v846
        %v891 = vpack.c.b16 %v849, %v847
        %v892 = vpack.c.b16 %v852, %v850
        %v893 = vpack.c.b16 %v853, %v851
        %v894 = vpack.c.b16 %v856, %v854
        %v895 = vpack.c.b16 %v857, %v855
        %v896 = vpack.c.b16 %v860, %v858
        %v897 = vpack.c.b16 %v861, %v859
        %v898 = vpack.c.b16 %v864, %v862
        %v899 = vpack.c.b16 %v865, %v863
        %v900 = vpack.c.b16 %v868, %v866
        %v901 = vpack.c.b16 %v869, %v867
        %934 = vmatprep.subr.bf16.mxu0 %v885
        %935 = vmatpush1.bf16.msra.mxu0 %v884
        %936 = vmatprep.subr.bf16.mxu0 %v883
        %937 = vmatpush1.bf16.msra.mxu0 %v882
        %938 = vmatprep.subr.bf16.mxu0 %v881
        %939 = vmatpush1.bf16.msra.mxu0 %v880
        %940 = vmatprep.subr.bf16.mxu0 %v879
        %941 = vmatpush1.bf16.msra.mxu0 %v878
        %942 = vmatprep.subr.bf16.mxu0 %v877
        %943 = vmatpush1.bf16.msra.mxu0 %v876
        %944 = vmatprep.subr.bf16.mxu0 %v875
        %945 = vmatpush1.bf16.msra.mxu0 %v874
        %946 = vmatprep.subr.bf16.mxu0 %v873
        %947 = vmatpush1.bf16.msra.mxu0 %v872
        %948 = vmatprep.subr.bf16.mxu0 %v871
        %949 = vmatpush1.bf16.msra.mxu0 %v870
        %950 = vmatprep.subr.bf16.mxu0 %v901
        %951 = vmatpush2.bf16.msra.mxu0 %v900
        %952 = vmatprep.subr.bf16.mxu0 %v899
        %953 = vmatpush2.bf16.msra.mxu0 %v898
        %954 = vmatprep.subr.bf16.mxu0 %v897
        %955 = vmatpush2.bf16.msra.mxu0 %v896
        %956 = vmatprep.subr.bf16.mxu0 %v895
        %957 = vmatpush2.bf16.msra.mxu0 %v894
        %958 = vmatprep.subr.bf16.mxu0 %v893
        %959 = vmatpush2.bf16.msra.mxu0 %v892
        %960 = vmatprep.subr.bf16.mxu0 %v891
        %961 = vmatpush2.bf16.msra.mxu0 %v890
        %962 = vmatprep.subr.bf16.mxu0 %v889
        %963 = vmatpush2.bf16.msra.mxu0 %v888
        %964 = vmatprep.subr.bf16.mxu0 %v887
        %965 = vmatpush2.bf16.msra.mxu0 %v886
        %966 = vmatprep.mubr.bf16.mxu0 %v729
        %967 = vmatmul.mubr.bf16.gmra.mxu0 %v728
        %v968 = vpop.f32.mrf.mxu0
        %v969 = vadd.f32 %v767, %v968
        %v970 = vpop.f32.mrf.mxu0
        %v971 = vadd.f32 %v771, %v970
        %v972 = vpop.f32.mrf.mxu0
        %v973 = vpop.f32.mrf.mxu0
        %974 = vdwg.mxu0
        %v975 = vmax.f32 %v969, 0.0
        %v976 = vmax.f32 %v971, 0.0
        %v977 = vpack.c.bf16 %v975, %v975
        %v978 = vpack.c.bf16 %v976, %v976
        %v979 = vld [vmem:[%s4] sm:$0xf]
        %v980 = vld [vmem:[%s4 + $0x4] sm:$0xf]
        %v981 = vld [vmem:[%s4 + $0x8] sm:$0xf]
        %v982 = vld [vmem:[%s4 + $0xc] sm:$0xf]
        %v983 = vld [vmem:[%s4 + $0x10] sm:$0xf]
        %v984 = vld [vmem:[%s4 + $0x14] sm:$0xf]
        %v985 = vld [vmem:[%s4 + $0x18] sm:$0xf]
        %v986 = vld [vmem:[%s4 + $0x1c] sm:$0xf]
        %v987 = vld [vmem:[%s4 + $0x20] sm:$0xf]
        %v988 = vld [vmem:[%s4 + $0x24] sm:$0xf]
        %v989 = vld [vmem:[%s4 + $0x28] sm:$0xf]
        %v990 = vld [vmem:[%s4 + $0x2c] sm:$0xf]
        %v991 = vld [vmem:[%s4 + $0x30] sm:$0xf]
        %v992 = vld [vmem:[%s4 + $0x34] sm:$0xf]
        %v993 = vld [vmem:[%s4 + $0x38] sm:$0xf]
        %v994 = vld [vmem:[%s4 + $0x3c] sm:$0xf]
        %v995 = vld [vmem:[%s4 + $0x40] sm:$0xf]
        %v996 = vld [vmem:[%s4 + $0x44] sm:$0xf]
        %v997 = vld [vmem:[%s4 + $0x48] sm:$0xf]
        %v998 = vld [vmem:[%s4 + $0x4c] sm:$0xf]
        %v999 = vld [vmem:[%s4 + $0x50] sm:$0xf]
        %v1000 = vld [vmem:[%s4 + $0x54] sm:$0xf]
        %v1001 = vld [vmem:[%s4 + $0x58] sm:$0xf]
        %v1002 = vld [vmem:[%s4 + $0x5c] sm:$0xf]
        %v1003 = vld [vmem:[%s4 + $0x60] sm:$0xf]
        %v1004 = vld [vmem:[%s4 + $0x64] sm:$0xf]
        %v1005 = vld [vmem:[%s4 + $0x68] sm:$0xf]
        %v1006 = vld [vmem:[%s4 + $0x6c] sm:$0xf]
        %v1007 = vld [vmem:[%s4 + $0x70] sm:$0xf]
        %v1008 = vld [vmem:[%s4 + $0x74] sm:$0xf]
        %v1009 = vld [vmem:[%s4 + $0x78] sm:$0xf]
        %v1010 = vld [vmem:[%s4 + $0x7c] sm:$0xf]
        %v1011 = vld [vmem:[%s5] sm:$0x1]
        %v1013 = vlaneseq
        %v1014 = vshrl.u32 %v1013, 7
        %v1015 = vsub.s32 0, %v1014
        %v1016 = vrot.slane %v1011, %v1015
        %v1050 = vunpack.c.l.b16 %v979
        %v1051 = vunpack.c.l.b16 %v980
        %v1052 = vunpack.c.l.b16 %v981
        %v1053 = vunpack.c.l.b16 %v982
        %v1054 = vunpack.c.l.b16 %v983
        %v1055 = vunpack.c.l.b16 %v984
        %v1056 = vunpack.c.l.b16 %v985
        %v1057 = vunpack.c.l.b16 %v986
        %v1058 = vunpack.c.l.b16 %v987
        %v1059 = vunpack.c.l.b16 %v988
        %v1060 = vunpack.c.l.b16 %v989
        %v1061 = vunpack.c.l.b16 %v990
        %v1062 = vunpack.c.l.b16 %v991
        %v1063 = vunpack.c.l.b16 %v992
        %v1064 = vunpack.c.l.b16 %v993
        %v1065 = vunpack.c.l.b16 %v994
        %v1066 = vunpack.c.l.b16 %v995
        %v1067 = vunpack.c.l.b16 %v996
        %v1068 = vunpack.c.l.b16 %v997
        %v1069 = vunpack.c.l.b16 %v998
        %v1070 = vunpack.c.l.b16 %v999
        %v1071 = vunpack.c.l.b16 %v1000
        %v1072 = vunpack.c.l.b16 %v1001
        %v1073 = vunpack.c.l.b16 %v1002
        %v1074 = vunpack.c.l.b16 %v1003
        %v1075 = vunpack.c.l.b16 %v1004
        %v1076 = vunpack.c.l.b16 %v1005
        %v1077 = vunpack.c.l.b16 %v1006
        %v1078 = vunpack.c.l.b16 %v1007
        %v1079 = vunpack.c.l.b16 %v1008
        %v1080 = vunpack.c.l.b16 %v1009
        %v1081 = vunpack.c.l.b16 %v1010
        %v1082 = vpack.c.b16 %v1051, %v1050
        %v1083 = vpack.c.b16 %v1053, %v1052
        %v1084 = vpack.c.b16 %v1055, %v1054
        %v1085 = vpack.c.b16 %v1057, %v1056
        %v1086 = vpack.c.b16 %v1059, %v1058
        %v1087 = vpack.c.b16 %v1061, %v1060
        %v1088 = vpack.c.b16 %v1063, %v1062
        %v1089 = vpack.c.b16 %v1065, %v1064
        %v1090 = vpack.c.b16 %v1067, %v1066
        %v1091 = vpack.c.b16 %v1069, %v1068
        %v1092 = vpack.c.b16 %v1071, %v1070
        %v1093 = vpack.c.b16 %v1073, %v1072
        %v1094 = vpack.c.b16 %v1075, %v1074
        %v1095 = vpack.c.b16 %v1077, %v1076
        %v1096 = vpack.c.b16 %v1079, %v1078
        %v1097 = vpack.c.b16 %v1081, %v1080
        %1114 = vmatprep.subr.bf16.mxu0 0
        %1115 = vmatpush1.bf16.msra.mxu0 %v1089
        %1116 = vmatprep.subr.bf16.mxu0 0
        %1117 = vmatpush1.bf16.msra.mxu0 %v1088
        %1118 = vmatprep.subr.bf16.mxu0 0
        %1119 = vmatpush1.bf16.msra.mxu0 %v1087
        %1120 = vmatprep.subr.bf16.mxu0 0
        %1121 = vmatpush1.bf16.msra.mxu0 %v1086
        %1122 = vmatprep.subr.bf16.mxu0 0
        %1123 = vmatpush1.bf16.msra.mxu0 %v1085
        %1124 = vmatprep.subr.bf16.mxu0 0
        %1125 = vmatpush1.bf16.msra.mxu0 %v1084
        %1126 = vmatprep.subr.bf16.mxu0 0
        %1127 = vmatpush1.bf16.msra.mxu0 %v1083
        %1128 = vmatprep.subr.bf16.mxu0 0
        %1129 = vmatpush1.bf16.msra.mxu0 %v1082
        %1130 = vmatprep.subr.bf16.mxu0 0
        %1131 = vmatpush2.bf16.msra.mxu0 %v1097
        %1132 = vmatprep.subr.bf16.mxu0 0
        %1133 = vmatpush2.bf16.msra.mxu0 %v1096
        %1134 = vmatprep.subr.bf16.mxu0 0
        %1135 = vmatpush2.bf16.msra.mxu0 %v1095
        %1136 = vmatprep.subr.bf16.mxu0 0
        %1137 = vmatpush2.bf16.msra.mxu0 %v1094
        %1138 = vmatprep.subr.bf16.mxu0 0
        %1139 = vmatpush2.bf16.msra.mxu0 %v1093
        %1140 = vmatprep.subr.bf16.mxu0 0
        %1141 = vmatpush2.bf16.msra.mxu0 %v1092
        %1142 = vmatprep.subr.bf16.mxu0 0
        %1143 = vmatpush2.bf16.msra.mxu0 %v1091
        %1144 = vmatprep.subr.bf16.mxu0 0
        %1145 = vmatpush2.bf16.msra.mxu0 %v1090
        %1146 = vmatprep.mubr.bf16.mxu0 %v978
        %1147 = vmatmul.mubr.bf16.gmra.mxu0 %v977
        %v1148 = vpop.f32.mrf.mxu0
        %v1149 = vadd.f32 %v1016, %v1148
        %v1150 = vpop.f32.mrf.mxu0
        %v1151 = vpop.f32.mrf.mxu0
        %v1152 = vpop.f32.mrf.mxu0
        %1153 = vdwg.mxu0
        %v1154 = vmax.f32 %v1149, 0.0
        %v1155 = vpack.c.bf16 %v1154, %v1154
        %v1156 = vld [vmem:[%s6] sm:$0xf]
        %v1157 = vld [vmem:[%s6 + $0x4] sm:$0xf]
        %v1158 = vld [vmem:[%s6 + $0x8] sm:$0xf]
        %v1159 = vld [vmem:[%s6 + $0xc] sm:$0xf]
        %v1160 = vld [vmem:[%s6 + $0x10] sm:$0xf]
        %v1161 = vld [vmem:[%s6 + $0x14] sm:$0xf]
        %v1162 = vld [vmem:[%s6 + $0x18] sm:$0xf]
        %v1163 = vld [vmem:[%s6 + $0x1c] sm:$0xf]
        %v1164 = vld [vmem:[%s6 + $0x20] sm:$0xf]
        %v1165 = vld [vmem:[%s6 + $0x24] sm:$0xf]
        %v1166 = vld [vmem:[%s6 + $0x28] sm:$0xf]
        %v1167 = vld [vmem:[%s6 + $0x2c] sm:$0xf]
        %v1168 = vld [vmem:[%s6 + $0x30] sm:$0xf]
        %v1169 = vld [vmem:[%s6 + $0x34] sm:$0xf]
        %v1170 = vld [vmem:[%s6 + $0x38] sm:$0xf]
        %v1171 = vld [vmem:[%s6 + $0x3c] sm:$0xf]
        %v1172 = vld [vmem:[%s7] sm:$0x1]
        %v1174 = vlaneseq
        %v1175 = vshrl.u32 %v1174, 7
        %v1176 = vsub.s32 0, %v1175
        %v1177 = vrot.slane %v1172, %v1176
        %v1195 = vunpack.c.l.b16 %v1156
        %v1196 = vunpack.c.l.b16 %v1157
        %v1197 = vunpack.c.l.b16 %v1158
        %v1198 = vunpack.c.l.b16 %v1159
        %v1199 = vunpack.c.l.b16 %v1160
        %v1200 = vunpack.c.l.b16 %v1161
        %v1201 = vunpack.c.l.b16 %v1162
        %v1202 = vunpack.c.l.b16 %v1163
        %v1203 = vunpack.c.l.b16 %v1164
        %v1204 = vunpack.c.l.b16 %v1165
        %v1205 = vunpack.c.l.b16 %v1166
        %v1206 = vunpack.c.l.b16 %v1167
        %v1207 = vunpack.c.l.b16 %v1168
        %v1208 = vunpack.c.l.b16 %v1169
        %v1209 = vunpack.c.l.b16 %v1170
        %v1210 = vunpack.c.l.b16 %v1171
        %v1211 = vpack.c.b16 %v1196, %v1195
        %v1212 = vpack.c.b16 %v1198, %v1197
        %v1213 = vpack.c.b16 %v1200, %v1199
        %v1214 = vpack.c.b16 %v1202, %v1201
        %v1215 = vpack.c.b16 %v1204, %v1203
        %v1216 = vpack.c.b16 %v1206, %v1205
        %v1217 = vpack.c.b16 %v1208, %v1207
        %v1218 = vpack.c.b16 %v1210, %v1209
        %1227 = vmatprep.subr.bf16.mxu0 0
        %1228 = vmatpush1.bf16.msra.mxu0 %v1218
        %1229 = vmatprep.subr.bf16.mxu0 0
        %1230 = vmatpush1.bf16.msra.mxu0 %v1217
        %1231 = vmatprep.subr.bf16.mxu0 0
        %1232 = vmatpush1.bf16.msra.mxu0 %v1216
        %1233 = vmatprep.subr.bf16.mxu0 0
        %1234 = vmatpush1.bf16.msra.mxu0 %v1215
        %1235 = vmatprep.subr.bf16.mxu0 0
        %1236 = vmatpush1.bf16.msra.mxu0 %v1214
        %1237 = vmatprep.subr.bf16.mxu0 0
        %1238 = vmatpush1.bf16.msra.mxu0 %v1213
        %1239 = vmatprep.subr.bf16.mxu0 0
        %1240 = vmatpush1.bf16.msra.mxu0 %v1212
        %1241 = vmatprep.subr.bf16.mxu0 0
        %1242 = vmatpush1.bf16.msra.mxu0 %v1211
        %1243 = vmatprep.subr.bf16.mxu0 0
        %1244 = vmatpush2.bf16.msra.mxu0 0
        %1245 = vmatprep.subr.bf16.mxu0 0
        %1246 = vmatpush2.bf16.msra.mxu0 0
        %1247 = vmatprep.subr.bf16.mxu0 0
        %1248 = vmatpush2.bf16.msra.mxu0 0
        %1249 = vmatprep.subr.bf16.mxu0 0
        %1250 = vmatpush2.bf16.msra.mxu0 0
        %1251 = vmatprep.subr.bf16.mxu0 0
        %1252 = vmatpush2.bf16.msra.mxu0 0
        %1253 = vmatprep.subr.bf16.mxu0 0
        %1254 = vmatpush2.bf16.msra.mxu0 0
        %1255 = vmatprep.subr.bf16.mxu0 0
        %1256 = vmatpush2.bf16.msra.mxu0 0
        %1257 = vmatprep.subr.bf16.mxu0 0
        %1258 = vmatpush2.bf16.msra.mxu0 0
        %1259 = vmatprep.mubr.bf16.mxu0 0
        %1260 = vmatmul.mubr.bf16.gmra.mxu0 %v1155
        %v1261 = vpop.f32.mrf.mxu0
        %v1262 = vadd.f32 %v1177, %v1261
        %v1263 = vpop.f32.mrf.mxu0
        %v1264 = vpop.f32.mrf.mxu0
        %v1265 = vpop.f32.mrf.mxu0
        %1266 = vdwg.mxu0
        %v1267 = vmax.f32 %v1262, 0.0
        %v1268 = vpack.c.bf16 %v1267, %v1267
        %v1269 = vld [vmem:[%s8] sm:$0xff]
        %v1270 = vld [vmem:[%s8 + $0x8] sm:$0xff]
        %v1271 = vld [vmem:[%s8 + $0x10] sm:$0xff]
        %v1272 = vld [vmem:[%s8 + $0x18] sm:$0xff]
        %v1273 = vld [vmem:[%s8 + $0x20] sm:$0xff]
        %v1274 = vld [vmem:[%s8 + $0x28] sm:$0xff]
        %v1275 = vld [vmem:[%s8 + $0x30] sm:$0xff]
        %v1276 = vld [vmem:[%s8 + $0x38] sm:$0xff]
        %v1277 = vld [vmem:[%s9] sm:$0x3]
        %v1279 = vlaneseq
        %v1280 = vshrl.u32 %v1279, 7
        %v1281 = vsub.s32 0, %v1280
        %v1282 = vrot.slane %v1277, %v1281
        %v1283 = vlaneseq
        %v1284 = vshrl.u32 %v1283, 7
        %v1285 = vsub.s32 1, %v1284
        %v1286 = vrot.slane %v1277, %v1285
        %v1297 = vunpack.c.l.b16 %v1269
        %v1298 = vunpack.c.h.b16 %v1269
        %v1299 = vunpack.c.l.b16 %v1270
        %v1300 = vunpack.c.h.b16 %v1270
        %v1301 = vunpack.c.l.b16 %v1271
        %v1302 = vunpack.c.h.b16 %v1271
        %v1303 = vunpack.c.l.b16 %v1272
        %v1304 = vunpack.c.h.b16 %v1272
        %v1305 = vunpack.c.l.b16 %v1273
        %v1306 = vunpack.c.h.b16 %v1273
        %v1307 = vunpack.c.l.b16 %v1274
        %v1308 = vunpack.c.h.b16 %v1274
        %v1309 = vunpack.c.l.b16 %v1275
        %v1310 = vunpack.c.h.b16 %v1275
        %v1311 = vunpack.c.l.b16 %v1276
        %v1312 = vunpack.c.h.b16 %v1276
        %v1313 = vpack.c.b16 %v1299, %v1297
        %v1314 = vpack.c.b16 %v1300, %v1298
        %v1315 = vpack.c.b16 %v1303, %v1301
        %v1316 = vpack.c.b16 %v1304, %v1302
        %v1317 = vpack.c.b16 %v1307, %v1305
        %v1318 = vpack.c.b16 %v1308, %v1306
        %v1319 = vpack.c.b16 %v1311, %v1309
        %v1320 = vpack.c.b16 %v1312, %v1310
        %vm1329 = vcmask 523264
        %v1331 = vsel %vm1329, %v1268, 0
        %1333 = vmatprep.subr.bf16.mxu0 0
        %1334 = vmatpush1.bf16.msra.mxu0 0
        %1335 = vmatprep.subr.bf16.mxu0 0
        %1336 = vmatpush1.bf16.msra.mxu0 0
        %1337 = vmatprep.subr.bf16.mxu0 0
        %1338 = vmatpush1.bf16.msra.mxu0 0
        %1339 = vmatprep.subr.bf16.mxu0 0
        %1340 = vmatpush1.bf16.msra.mxu0 0
        %1341 = vmatprep.subr.bf16.mxu0 %v1320
        %1342 = vmatpush1.bf16.msra.mxu0 %v1319
        %1343 = vmatprep.subr.bf16.mxu0 %v1318
        %1344 = vmatpush1.bf16.msra.mxu0 %v1317
        %1345 = vmatprep.subr.bf16.mxu0 %v1316
        %1346 = vmatpush1.bf16.msra.mxu0 %v1315
        %1347 = vmatprep.subr.bf16.mxu0 %v1314
        %1348 = vmatpush1.bf16.msra.mxu0 %v1313
        %1349 = vmatprep.subr.bf16.mxu0 0
        %1350 = vmatpush2.bf16.msra.mxu0 0
        %1351 = vmatprep.subr.bf16.mxu0 0
        %1352 = vmatpush2.bf16.msra.mxu0 0
        %1353 = vmatprep.subr.bf16.mxu0 0
        %1354 = vmatpush2.bf16.msra.mxu0 0
        %1355 = vmatprep.subr.bf16.mxu0 0
        %1356 = vmatpush2.bf16.msra.mxu0 0
        %1357 = vmatprep.subr.bf16.mxu0 0
        %1358 = vmatpush2.bf16.msra.mxu0 0
        %1359 = vmatprep.subr.bf16.mxu0 0
        %1360 = vmatpush2.bf16.msra.mxu0 0
        %1361 = vmatprep.subr.bf16.mxu0 0
        %1362 = vmatpush2.bf16.msra.mxu0 0
        %1363 = vmatprep.subr.bf16.mxu0 0
        %1364 = vmatpush2.bf16.msra.mxu0 0
        %1365 = vmatprep.mubr.bf16.mxu0 0
        %1366 = vmatmul.mubr.bf16.gmra.mxu0 %v1331
        %v1367 = vpop.f32.mrf.mxu0
        %v1368 = vadd.f32 %v1282, %v1367
        %v1369 = vpop.f32.mrf.mxu0
        %v1370 = vadd.f32 %v1286, %v1369
        %v1371 = vpop.f32.mrf.mxu0
        %v1372 = vpop.f32.mrf.mxu0
        %1373 = vdwg.mxu0
        %v1374 = vld [vmem:[%s644] sm:$0xff]
        %v1375 = vmul.f32 %v1370, 0.5
        %v1376 = vmul.f32 %v1375, 1.442695
        %v1377 = vpow.pop %v1376
        %v1378 = vmul.f32 %v1374, %v1377
        %v1379 = vadd.f32 %v1378, %v1368
        %v1380 = vpack.c.bf16 %v1379, %v1379
        %v1381 = vld [vmem:[%s10] sm:$0xf]
        %v1382 = vld [vmem:[%s10 + $0x4] sm:$0xf]
        %v1383 = vld [vmem:[%s10 + $0x8] sm:$0xf]
        %v1384 = vld [vmem:[%s10 + $0xc] sm:$0xf]
        %v1385 = vld [vmem:[%s10 + $0x10] sm:$0xf]
        %v1386 = vld [vmem:[%s10 + $0x14] sm:$0xf]
        %v1387 = vld [vmem:[%s10 + $0x18] sm:$0xf]
        %v1388 = vld [vmem:[%s10 + $0x1c] sm:$0xf]
        %v1389 = vld [vmem:[%s10 + $0x20] sm:$0xf]
        %v1390 = vld [vmem:[%s10 + $0x24] sm:$0xf]
        %v1391 = vld [vmem:[%s10 + $0x28] sm:$0xf]
        %v1392 = vld [vmem:[%s10 + $0x2c] sm:$0xf]
        %v1393 = vld [vmem:[%s10 + $0x30] sm:$0xf]
        %v1394 = vld [vmem:[%s10 + $0x34] sm:$0xf]
        %v1395 = vld [vmem:[%s10 + $0x38] sm:$0xf]
        %v1396 = vld [vmem:[%s10 + $0x3c] sm:$0xf]
        %v1397 = vld [vmem:[%s11] sm:$0x1]
        %v1399 = vlaneseq
        %v1400 = vshrl.u32 %v1399, 7
        %v1401 = vsub.s32 0, %v1400
        %v1402 = vrot.slane %v1397, %v1401
        %v1420 = vunpack.c.l.b16 %v1381
        %v1421 = vunpack.c.l.b16 %v1382
        %v1422 = vunpack.c.l.b16 %v1383
        %v1423 = vunpack.c.l.b16 %v1384
        %v1424 = vunpack.c.l.b16 %v1385
        %v1425 = vunpack.c.l.b16 %v1386
        %v1426 = vunpack.c.l.b16 %v1387
        %v1427 = vunpack.c.l.b16 %v1388
        %v1428 = vunpack.c.l.b16 %v1389
        %v1429 = vunpack.c.l.b16 %v1390
        %v1430 = vunpack.c.l.b16 %v1391
        %v1431 = vunpack.c.l.b16 %v1392
        %v1432 = vunpack.c.l.b16 %v1393
        %v1433 = vunpack.c.l.b16 %v1394
        %v1434 = vunpack.c.l.b16 %v1395
        %v1435 = vunpack.c.l.b16 %v1396
        %v1436 = vpack.c.b16 %v1421, %v1420
        %v1437 = vpack.c.b16 %v1423, %v1422
        %v1438 = vpack.c.b16 %v1425, %v1424
        %v1439 = vpack.c.b16 %v1427, %v1426
        %v1440 = vpack.c.b16 %v1429, %v1428
        %v1441 = vpack.c.b16 %v1431, %v1430
        %v1442 = vpack.c.b16 %v1433, %v1432
        %v1443 = vpack.c.b16 %v1435, %v1434
        %1452 = vmatprep.subr.bf16.mxu0 0
        %1453 = vmatpush1.bf16.msra.mxu0 %v1443
        %1454 = vmatprep.subr.bf16.mxu0 0
        %1455 = vmatpush1.bf16.msra.mxu0 %v1442
        %1456 = vmatprep.subr.bf16.mxu0 0
        %1457 = vmatpush1.bf16.msra.mxu0 %v1441
        %1458 = vmatprep.subr.bf16.mxu0 0
        %1459 = vmatpush1.bf16.msra.mxu0 %v1440
        %1460 = vmatprep.subr.bf16.mxu0 0
        %1461 = vmatpush1.bf16.msra.mxu0 %v1439
        %1462 = vmatprep.subr.bf16.mxu0 0
        %1463 = vmatpush1.bf16.msra.mxu0 %v1438
        %1464 = vmatprep.subr.bf16.mxu0 0
        %1465 = vmatpush1.bf16.msra.mxu0 %v1437
        %1466 = vmatprep.subr.bf16.mxu0 0
        %1467 = vmatpush1.bf16.msra.mxu0 %v1436
        %1468 = vmatprep.subr.bf16.mxu0 0
        %1469 = vmatpush2.bf16.msra.mxu0 0
        %1470 = vmatprep.subr.bf16.mxu0 0
        %1471 = vmatpush2.bf16.msra.mxu0 0
        %1472 = vmatprep.subr.bf16.mxu0 0
        %1473 = vmatpush2.bf16.msra.mxu0 0
        %1474 = vmatprep.subr.bf16.mxu0 0
        %1475 = vmatpush2.bf16.msra.mxu0 0
        %1476 = vmatprep.subr.bf16.mxu0 0
        %1477 = vmatpush2.bf16.msra.mxu0 0
        %1478 = vmatprep.subr.bf16.mxu0 0
        %1479 = vmatpush2.bf16.msra.mxu0 0
        %1480 = vmatprep.subr.bf16.mxu0 0
        %1481 = vmatpush2.bf16.msra.mxu0 0
        %1482 = vmatprep.subr.bf16.mxu0 0
        %1483 = vmatpush2.bf16.msra.mxu0 0
        %1484 = vmatprep.mubr.bf16.mxu0 0
        %1485 = vmatmul.mubr.bf16.gmra.mxu0 %v1380
        %v1486 = vpop.f32.mrf.mxu0
        %v1487 = vadd.f32 %v1402, %v1486
        %v1488 = vpop.f32.mrf.mxu0
        %v1489 = vpop.f32.mrf.mxu0
        %v1490 = vpop.f32.mrf.mxu0
        %1491 = vdwg.mxu0
        %v1492 = vmax.f32 %v1487, 0.0
        %v1493 = vpack.c.bf16 %v1492, %v1492
        %v1494 = vld [vmem:[#allocation8] sm:$0xf]
        %v1495 = vld [vmem:[#allocation8 + $0x4] sm:$0xf]
        %v1496 = vld [vmem:[#allocation8 + $0x8] sm:$0xf]
        %v1497 = vld [vmem:[#allocation8 + $0xc] sm:$0xf]
        %v1498 = vld [vmem:[#allocation8 + $0x10] sm:$0xf]
        %v1499 = vld [vmem:[#allocation8 + $0x14] sm:$0xf]
        %v1500 = vld [vmem:[#allocation8 + $0x18] sm:$0xf]
        %v1501 = vld [vmem:[#allocation8 + $0x1c] sm:$0xf]
        %v1502 = vld [vmem:[%s13] sm:$0x1]
        %v1504 = vlaneseq
        %v1505 = vshrl.u32 %v1504, 7
        %v1506 = vsub.s32 0, %v1505
        %v1507 = vrot.slane %v1502, %v1506
        %v1517 = vunpack.c.l.b16 %v1494
        %v1518 = vunpack.c.l.b16 %v1495
        %v1519 = vunpack.c.l.b16 %v1496
        %v1520 = vunpack.c.l.b16 %v1497
        %v1521 = vunpack.c.l.b16 %v1498
        %v1522 = vunpack.c.l.b16 %v1499
        %v1523 = vunpack.c.l.b16 %v1500
        %v1524 = vunpack.c.l.b16 %v1501
        %v1525 = vpack.c.b16 %v1518, %v1517
        %v1526 = vpack.c.b16 %v1520, %v1519
        %v1527 = vpack.c.b16 %v1522, %v1521
        %v1528 = vpack.c.b16 %v1524, %v1523
        %v1534 = vsel %vm1329, %v1493, 0
        %1536 = vmatprep.subr.bf16.mxu0 0
        %1537 = vmatpush1.bf16.msra.mxu0 0
        %1538 = vmatprep.subr.bf16.mxu0 0
        %1539 = vmatpush1.bf16.msra.mxu0 0
        %1540 = vmatprep.subr.bf16.mxu0 0
        %1541 = vmatpush1.bf16.msra.mxu0 0
        %1542 = vmatprep.subr.bf16.mxu0 0
        %1543 = vmatpush1.bf16.msra.mxu0 0
        %1544 = vmatprep.subr.bf16.mxu0 0
        %1545 = vmatpush1.bf16.msra.mxu0 %v1528
        %1546 = vmatprep.subr.bf16.mxu0 0
        %1547 = vmatpush1.bf16.msra.mxu0 %v1527
        %1548 = vmatprep.subr.bf16.mxu0 0
        %1549 = vmatpush1.bf16.msra.mxu0 %v1526
        %1550 = vmatprep.subr.bf16.mxu0 0
        %1551 = vmatpush1.bf16.msra.mxu0 %v1525
        %1552 = vmatprep.subr.bf16.mxu0 0
        %1553 = vmatpush2.bf16.msra.mxu0 0
        %1554 = vmatprep.subr.bf16.mxu0 0
        %1555 = vmatpush2.bf16.msra.mxu0 0
        %1556 = vmatprep.subr.bf16.mxu0 0
        %1557 = vmatpush2.bf16.msra.mxu0 0
        %1558 = vmatprep.subr.bf16.mxu0 0
        %1559 = vmatpush2.bf16.msra.mxu0 0
        %1560 = vmatprep.subr.bf16.mxu0 0
        %1561 = vmatpush2.bf16.msra.mxu0 0
        %1562 = vmatprep.subr.bf16.mxu0 0
        %1563 = vmatpush2.bf16.msra.mxu0 0
        %1564 = vmatprep.subr.bf16.mxu0 0
        %1565 = vmatpush2.bf16.msra.mxu0 0
        %1566 = vmatprep.subr.bf16.mxu0 0
        %1567 = vmatpush2.bf16.msra.mxu0 0
        %1568 = vmatprep.mubr.bf16.mxu0 0
        %1569 = vmatmul.mubr.bf16.gmra.mxu0 %v1534
        %v1570 = vpop.f32.mrf.mxu0
        %v1571 = vadd.f32 %v1507, %v1570
        %v1572 = vpop.f32.mrf.mxu0
        %v1573 = vpop.f32.mrf.mxu0
        %v1574 = vpop.f32.mrf.mxu0
        %1575 = vdwg.mxu0
        %v1576 = vmax.f32 %v1571, 0.0
        %v1577 = vpack.c.bf16 %v1576, %v1576
        %v1578 = vld [vmem:[#allocation10] sm:$0xff]
        %v1579 = vld [vmem:[#allocation10 + $0x8] sm:$0xff]
        %v1580 = vld [vmem:[#allocation10 + $0x10] sm:$0xff]
        %v1581 = vld [vmem:[#allocation10 + $0x18] sm:$0xff]
        %v1582 = vld [vmem:[#allocation10 + $0x20] sm:$0xff]
        %v1583 = vld [vmem:[#allocation10 + $0x28] sm:$0xff]
        %v1584 = vld [vmem:[#allocation10 + $0x30] sm:$0xff]
        %v1585 = vld [vmem:[#allocation10 + $0x38] sm:$0xff]
        %v1586 = vld [vmem:[#allocation10 + $0x40] sm:$0xff]
        %v1587 = vld [vmem:[#allocation10 + $0x48] sm:$0xff]
        %v1588 = vld [vmem:[#allocation10 + $0x50] sm:$0xff]
        %v1589 = vld [vmem:[#allocation10 + $0x58] sm:$0xff]
        %v1590 = vld [vmem:[#allocation10 + $0x60] sm:$0xff]
        %v1591 = vld [vmem:[#allocation10 + $0x68] sm:$0xff]
        %v1592 = vld [vmem:[#allocation10 + $0x70] sm:$0xff]
        %v1593 = vld [vmem:[#allocation10 + $0x78] sm:$0xff]
        %v1594 = vld [vmem:[%s15] sm:$0x3]
        %v1596 = vlaneseq
        %v1597 = vshrl.u32 %v1596, 7
        %v1598 = vsub.s32 0, %v1597
        %v1599 = vrot.slane %v1594, %v1598
        %v1600 = vlaneseq
        %v1601 = vshrl.u32 %v1600, 7
        %v1602 = vsub.s32 1, %v1601
        %v1603 = vrot.slane %v1594, %v1602
        %v1622 = vunpack.c.l.b16 %v1578
        %v1623 = vunpack.c.h.b16 %v1578
        %v1624 = vunpack.c.l.b16 %v1579
        %v1625 = vunpack.c.h.b16 %v1579
        %v1626 = vunpack.c.l.b16 %v1580
        %v1627 = vunpack.c.h.b16 %v1580
        %v1628 = vunpack.c.l.b16 %v1581
        %v1629 = vunpack.c.h.b16 %v1581
        %v1630 = vunpack.c.l.b16 %v1582
        %v1631 = vunpack.c.h.b16 %v1582
        %v1632 = vunpack.c.l.b16 %v1583
        %v1633 = vunpack.c.h.b16 %v1583
        %v1634 = vunpack.c.l.b16 %v1584
        %v1635 = vunpack.c.h.b16 %v1584
        %v1636 = vunpack.c.l.b16 %v1585
        %v1637 = vunpack.c.h.b16 %v1585
        %v1638 = vunpack.c.l.b16 %v1586
        %v1639 = vunpack.c.h.b16 %v1586
        %v1640 = vunpack.c.l.b16 %v1587
        %v1641 = vunpack.c.h.b16 %v1587
        %v1642 = vunpack.c.l.b16 %v1588
        %v1643 = vunpack.c.h.b16 %v1588
        %v1644 = vunpack.c.l.b16 %v1589
        %v1645 = vunpack.c.h.b16 %v1589
        %v1646 = vunpack.c.l.b16 %v1590
        %v1647 = vunpack.c.h.b16 %v1590
        %v1648 = vunpack.c.l.b16 %v1591
        %v1649 = vunpack.c.h.b16 %v1591
        %v1650 = vunpack.c.l.b16 %v1592
        %v1651 = vunpack.c.h.b16 %v1592
        %v1652 = vunpack.c.l.b16 %v1593
        %v1653 = vunpack.c.h.b16 %v1593
        %v1654 = vpack.c.b16 %v1624, %v1622
        %v1655 = vpack.c.b16 %v1625, %v1623
        %v1656 = vpack.c.b16 %v1628, %v1626
        %v1657 = vpack.c.b16 %v1629, %v1627
        %v1658 = vpack.c.b16 %v1632, %v1630
        %v1659 = vpack.c.b16 %v1633, %v1631
        %v1660 = vpack.c.b16 %v1636, %v1634
        %v1661 = vpack.c.b16 %v1637, %v1635
        %v1662 = vpack.c.b16 %v1640, %v1638
        %v1663 = vpack.c.b16 %v1641, %v1639
        %v1664 = vpack.c.b16 %v1644, %v1642
        %v1665 = vpack.c.b16 %v1645, %v1643
        %v1666 = vpack.c.b16 %v1648, %v1646
        %v1667 = vpack.c.b16 %v1649, %v1647
        %v1668 = vpack.c.b16 %v1652, %v1650
        %v1669 = vpack.c.b16 %v1653, %v1651
        %1686 = vmatprep.subr.bf16.mxu0 %v1669
        %1687 = vmatpush1.bf16.msra.mxu0 %v1668
        %1688 = vmatprep.subr.bf16.mxu0 %v1667
        %1689 = vmatpush1.bf16.msra.mxu0 %v1666
        %1690 = vmatprep.subr.bf16.mxu0 %v1665
        %1691 = vmatpush1.bf16.msra.mxu0 %v1664
        %1692 = vmatprep.subr.bf16.mxu0 %v1663
        %1693 = vmatpush1.bf16.msra.mxu0 %v1662
        %1694 = vmatprep.subr.bf16.mxu0 %v1661
        %1695 = vmatpush1.bf16.msra.mxu0 %v1660
        %1696 = vmatprep.subr.bf16.mxu0 %v1659
        %1697 = vmatpush1.bf16.msra.mxu0 %v1658
        %1698 = vmatprep.subr.bf16.mxu0 %v1657
        %1699 = vmatpush1.bf16.msra.mxu0 %v1656
        %1700 = vmatprep.subr.bf16.mxu0 %v1655
        %1701 = vmatpush1.bf16.msra.mxu0 %v1654
        %1702 = vmatprep.subr.bf16.mxu0 0
        %1703 = vmatpush2.bf16.msra.mxu0 0
        %1704 = vmatprep.subr.bf16.mxu0 0
        %1705 = vmatpush2.bf16.msra.mxu0 0
        %1706 = vmatprep.subr.bf16.mxu0 0
        %1707 = vmatpush2.bf16.msra.mxu0 0
        %1708 = vmatprep.subr.bf16.mxu0 0
        %1709 = vmatpush2.bf16.msra.mxu0 0
        %1710 = vmatprep.subr.bf16.mxu0 0
        %1711 = vmatpush2.bf16.msra.mxu0 0
        %1712 = vmatprep.subr.bf16.mxu0 0
        %1713 = vmatpush2.bf16.msra.mxu0 0
        %1714 = vmatprep.subr.bf16.mxu0 0
        %1715 = vmatpush2.bf16.msra.mxu0 0
        %1716 = vmatprep.subr.bf16.mxu0 0
        %1717 = vmatpush2.bf16.msra.mxu0 0
        %1718 = vmatprep.mubr.bf16.mxu0 0
        %1719 = vmatmul.mubr.bf16.gmra.mxu0 %v1577
        %v1720 = vpop.f32.mrf.mxu0
        %v1721 = vadd.f32 %v1599, %v1720
        %v1722 = vpop.f32.mrf.mxu0
        %v1723 = vadd.f32 %v1603, %v1722
        %v1724 = vpop.f32.mrf.mxu0
        %v1725 = vpop.f32.mrf.mxu0
        %1726 = vdwg.mxu0
        %v1727 = vmax.f32 %v1721, 0.0
        %v1728 = vmax.f32 %v1723, 0.0
        %v1729 = vpack.c.bf16 %v1727, %v1727
        %v1730 = vpack.c.bf16 %v1728, %v1728
        %v1731 = vld [vmem:[#allocation11] sm:$0xff]
        %v1732 = vld [vmem:[#allocation11 + $0x8] sm:$0xff]
        %v1733 = vld [vmem:[#allocation11 + $0x10] sm:$0xff]
        %v1734 = vld [vmem:[#allocation11 + $0x18] sm:$0xff]
        %v1735 = vld [vmem:[#allocation11 + $0x20] sm:$0xff]
        %v1736 = vld [vmem:[#allocation11 + $0x28] sm:$0xff]
        %v1737 = vld [vmem:[#allocation11 + $0x30] sm:$0xff]
        %v1738 = vld [vmem:[#allocation11 + $0x38] sm:$0xff]
        %v1739 = vld [vmem:[#allocation11 + $0x40] sm:$0xff]
        %v1740 = vld [vmem:[#allocation11 + $0x48] sm:$0xff]
        %v1741 = vld [vmem:[#allocation11 + $0x50] sm:$0xff]
        %v1742 = vld [vmem:[#allocation11 + $0x58] sm:$0xff]
        %v1743 = vld [vmem:[#allocation11 + $0x60] sm:$0xff]
        %v1744 = vld [vmem:[#allocation11 + $0x68] sm:$0xff]
        %v1745 = vld [vmem:[#allocation11 + $0x70] sm:$0xff]
        %v1746 = vld [vmem:[#allocation11 + $0x78] sm:$0xff]
        %v1747 = vld [vmem:[#allocation11 + $0x80] sm:$0xff]
        %v1748 = vld [vmem:[#allocation11 + $0x88] sm:$0xff]
        %v1749 = vld [vmem:[#allocation11 + $0x90] sm:$0xff]
        %v1750 = vld [vmem:[#allocation11 + $0x98] sm:$0xff]
        %v1751 = vld [vmem:[#allocation11 + $0xa0] sm:$0xff]
        %v1752 = vld [vmem:[#allocation11 + $0xa8] sm:$0xff]
        %v1753 = vld [vmem:[#allocation11 + $0xb0] sm:$0xff]
        %v1754 = vld [vmem:[#allocation11 + $0xb8] sm:$0xff]
        %v1755 = vld [vmem:[#allocation11 + $0xc0] sm:$0xff]
        %v1756 = vld [vmem:[#allocation11 + $0xc8] sm:$0xff]
        %v1757 = vld [vmem:[#allocation11 + $0xd0] sm:$0xff]
        %v1758 = vld [vmem:[#allocation11 + $0xd8] sm:$0xff]
        %v1759 = vld [vmem:[#allocation11 + $0xe0] sm:$0xff]
        %v1760 = vld [vmem:[#allocation11 + $0xe8] sm:$0xff]
        %v1761 = vld [vmem:[#allocation11 + $0xf0] sm:$0xff]
        %v1762 = vld [vmem:[#allocation11 + $0xf8] sm:$0xff]
        %v1763 = vld [vmem:[%s17] sm:$0x3]
        %v1765 = vlaneseq
        %v1766 = vshrl.u32 %v1765, 7
        %v1767 = vsub.s32 0, %v1766
        %v1768 = vrot.slane %v1763, %v1767
        %v1769 = vlaneseq
        %v1770 = vshrl.u32 %v1769, 7
        %v1771 = vsub.s32 1, %v1770
        %v1772 = vrot.slane %v1763, %v1771
        %v1807 = vunpack.c.l.b16 %v1731
        %v1808 = vunpack.c.h.b16 %v1731
        %v1809 = vunpack.c.l.b16 %v1732
        %v1810 = vunpack.c.h.b16 %v1732
        %v1811 = vunpack.c.l.b16 %v1733
        %v1812 = vunpack.c.h.b16 %v1733
        %v1813 = vunpack.c.l.b16 %v1734
        %v1814 = vunpack.c.h.b16 %v1734
        %v1815 = vunpack.c.l.b16 %v1735
        %v1816 = vunpack.c.h.b16 %v1735
        %v1817 = vunpack.c.l.b16 %v1736
        %v1818 = vunpack.c.h.b16 %v1736
        %v1819 = vunpack.c.l.b16 %v1737
        %v1820 = vunpack.c.h.b16 %v1737
        %v1821 = vunpack.c.l.b16 %v1738
        %v1822 = vunpack.c.h.b16 %v1738
        %v1823 = vunpack.c.l.b16 %v1739
        %v1824 = vunpack.c.h.b16 %v1739
        %v1825 = vunpack.c.l.b16 %v1740
        %v1826 = vunpack.c.h.b16 %v1740
        %v1827 = vunpack.c.l.b16 %v1741
        %v1828 = vunpack.c.h.b16 %v1741
        %v1829 = vunpack.c.l.b16 %v1742
        %v1830 = vunpack.c.h.b16 %v1742
        %v1831 = vunpack.c.l.b16 %v1743
        %v1832 = vunpack.c.h.b16 %v1743
        %v1833 = vunpack.c.l.b16 %v1744
        %v1834 = vunpack.c.h.b16 %v1744
        %v1835 = vunpack.c.l.b16 %v1745
        %v1836 = vunpack.c.h.b16 %v1745
        %v1837 = vunpack.c.l.b16 %v1746
        %v1838 = vunpack.c.h.b16 %v1746
        %v1839 = vunpack.c.l.b16 %v1747
        %v1840 = vunpack.c.h.b16 %v1747
        %v1841 = vunpack.c.l.b16 %v1748
        %v1842 = vunpack.c.h.b16 %v1748
        %v1843 = vunpack.c.l.b16 %v1749
        %v1844 = vunpack.c.h.b16 %v1749
        %v1845 = vunpack.c.l.b16 %v1750
        %v1846 = vunpack.c.h.b16 %v1750
        %v1847 = vunpack.c.l.b16 %v1751
        %v1848 = vunpack.c.h.b16 %v1751
        %v1849 = vunpack.c.l.b16 %v1752
        %v1850 = vunpack.c.h.b16 %v1752
        %v1851 = vunpack.c.l.b16 %v1753
        %v1852 = vunpack.c.h.b16 %v1753
        %v1853 = vunpack.c.l.b16 %v1754
        %v1854 = vunpack.c.h.b16 %v1754
        %v1855 = vunpack.c.l.b16 %v1755
        %v1856 = vunpack.c.h.b16 %v1755
        %v1857 = vunpack.c.l.b16 %v1756
        %v1858 = vunpack.c.h.b16 %v1756
        %v1859 = vunpack.c.l.b16 %v1757
        %v1860 = vunpack.c.h.b16 %v1757
        %v1861 = vunpack.c.l.b16 %v1758
        %v1862 = vunpack.c.h.b16 %v1758
        %v1863 = vunpack.c.l.b16 %v1759
        %v1864 = vunpack.c.h.b16 %v1759
        %v1865 = vunpack.c.l.b16 %v1760
        %v1866 = vunpack.c.h.b16 %v1760
        %v1867 = vunpack.c.l.b16 %v1761
        %v1868 = vunpack.c.h.b16 %v1761
        %v1869 = vunpack.c.l.b16 %v1762
        %v1870 = vunpack.c.h.b16 %v1762
        %v1871 = vpack.c.b16 %v1809, %v1807
        %v1872 = vpack.c.b16 %v1810, %v1808
        %v1873 = vpack.c.b16 %v1813, %v1811
        %v1874 = vpack.c.b16 %v1814, %v1812
        %v1875 = vpack.c.b16 %v1817, %v1815
        %v1876 = vpack.c.b16 %v1818, %v1816
        %v1877 = vpack.c.b16 %v1821, %v1819
        %v1878 = vpack.c.b16 %v1822, %v1820
        %v1879 = vpack.c.b16 %v1825, %v1823
        %v1880 = vpack.c.b16 %v1826, %v1824
        %v1881 = vpack.c.b16 %v1829, %v1827
        %v1882 = vpack.c.b16 %v1830, %v1828
        %v1883 = vpack.c.b16 %v1833, %v1831
        %v1884 = vpack.c.b16 %v1834, %v1832
        %v1885 = vpack.c.b16 %v1837, %v1835
        %v1886 = vpack.c.b16 %v1838, %v1836
        %v1887 = vpack.c.b16 %v1841, %v1839
        %v1888 = vpack.c.b16 %v1842, %v1840
        %v1889 = vpack.c.b16 %v1845, %v1843
        %v1890 = vpack.c.b16 %v1846, %v1844
        %v1891 = vpack.c.b16 %v1849, %v1847
        %v1892 = vpack.c.b16 %v1850, %v1848
        %v1893 = vpack.c.b16 %v1853, %v1851
        %v1894 = vpack.c.b16 %v1854, %v1852
        %v1895 = vpack.c.b16 %v1857, %v1855
        %v1896 = vpack.c.b16 %v1858, %v1856
        %v1897 = vpack.c.b16 %v1861, %v1859
        %v1898 = vpack.c.b16 %v1862, %v1860
        %v1899 = vpack.c.b16 %v1865, %v1863
        %v1900 = vpack.c.b16 %v1866, %v1864
        %v1901 = vpack.c.b16 %v1869, %v1867
        %v1902 = vpack.c.b16 %v1870, %v1868
        %1935 = vmatprep.subr.bf16.mxu0 %v1886
        %1936 = vmatpush1.bf16.msra.mxu0 %v1885
        %1937 = vmatprep.subr.bf16.mxu0 %v1884
        %1938 = vmatpush1.bf16.msra.mxu0 %v1883
        %1939 = vmatprep.subr.bf16.mxu0 %v1882
        %1940 = vmatpush1.bf16.msra.mxu0 %v1881
        %1941 = vmatprep.subr.bf16.mxu0 %v1880
        %1942 = vmatpush1.bf16.msra.mxu0 %v1879
        %1943 = vmatprep.subr.bf16.mxu0 %v1878
        %1944 = vmatpush1.bf16.msra.mxu0 %v1877
        %1945 = vmatprep.subr.bf16.mxu0 %v1876
        %1946 = vmatpush1.bf16.msra.mxu0 %v1875
        %1947 = vmatprep.subr.bf16.mxu0 %v1874
        %1948 = vmatpush1.bf16.msra.mxu0 %v1873
        %1949 = vmatprep.subr.bf16.mxu0 %v1872
        %1950 = vmatpush1.bf16.msra.mxu0 %v1871
        %1951 = vmatprep.subr.bf16.mxu0 %v1902
        %1952 = vmatpush2.bf16.msra.mxu0 %v1901
        %1953 = vmatprep.subr.bf16.mxu0 %v1900
        %1954 = vmatpush2.bf16.msra.mxu0 %v1899
        %1955 = vmatprep.subr.bf16.mxu0 %v1898
        %1956 = vmatpush2.bf16.msra.mxu0 %v1897
        %1957 = vmatprep.subr.bf16.mxu0 %v1896
        %1958 = vmatpush2.bf16.msra.mxu0 %v1895
        %1959 = vmatprep.subr.bf16.mxu0 %v1894
        %1960 = vmatpush2.bf16.msra.mxu0 %v1893
        %1961 = vmatprep.subr.bf16.mxu0 %v1892
        %1962 = vmatpush2.bf16.msra.mxu0 %v1891
        %1963 = vmatprep.subr.bf16.mxu0 %v1890
        %1964 = vmatpush2.bf16.msra.mxu0 %v1889
        %1965 = vmatprep.subr.bf16.mxu0 %v1888
        %1966 = vmatpush2.bf16.msra.mxu0 %v1887
        %1967 = vmatprep.mubr.bf16.mxu0 %v1730
        %1968 = vmatmul.mubr.bf16.gmra.mxu0 %v1729
        %v1969 = vpop.f32.mrf.mxu0
        %v1970 = vadd.f32 %v1768, %v1969
        %v1971 = vpop.f32.mrf.mxu0
        %v1972 = vadd.f32 %v1772, %v1971
        %v1973 = vpop.f32.mrf.mxu0
        %v1974 = vpop.f32.mrf.mxu0
        %1975 = vdwg.mxu0
        %v1976 = vmax.f32 %v1970, 0.0
        %v1977 = vmax.f32 %v1972, 0.0
        %v1978 = vpack.c.bf16 %v1976, %v1976
        %v1979 = vpack.c.bf16 %v1977, %v1977
        %v1982 = vunpack.c.l.b16 %v1978
        %v1983 = vunpack.c.l.b16 %v1979
        %v1984 = vpack.c.b16 %v1983, %v1982
        %1986 = vst [vmem:[%s717] sm:$0xff] %v1984
        %1987 = vst [vmem:[%s724] sm:$0xff] %v1368
        %1988 = vst [vmem:[%s724 + $0x8] sm:$0xff] %v1370
        %s1989 = sand.u32 %s441, 1
        %s1990 = scalar_lea.sflag [#allocation4], %s1989
        %s1991 = sand.u32 %s441, 1
        %s1992 = smul.addr %s1991, 8
        %s1993 = scalar_lea.vmem [#allocation13], %s1992
        %s1994 = sand.u32 %s467, 1
        %s1995 = scalar_lea.sflag [#allocation15], %s1994
        %s1996 = sand.u32 %s467, 1
        %s1997 = smul.addr %s1996, 16
        %s1998 = scalar_lea.vmem [#allocation14], %s1997
        // Predicated region
        $region117: #{tpu_custom_call.1} parent=91 // pred_check
          %p1999 = pneg %p451
        $region118: #{tpu_custom_call.1} parent=91 // pred_check_branch
          %2001 = sbr.rel (%p1999) target = $region120
        $region119: #{tpu_custom_call.1} parent=91 // pred_region
          %s2003 = ssub.s32 128, 128
          %2004 = vsyncadd %s1990, %s2003
          %s2005 = smul.addr %s45, 2
          %s2006 = smul.addr %s2005, 64
          %s2007 = scalar_lea.hbm %s18, %s2006
          %s2009 = sshll.u32 %s1993, 4
          %s2010 = int_to_ptr.vmem [resolvable:$true] %s2009
          %2012 = dma.vmem_to_hbm [thread:$0]  %s2010, 128, %s2007, %s1990
        $region120: #{tpu_custom_call.1} parent=91 // pred_fallthru
          _
        // Predicated region
        $region121: #{tpu_custom_call.1} parent=91 // pred_check
          %p2013 = pneg %p477
        $region122: #{tpu_custom_call.1} parent=91 // pred_check_branch
          %2015 = sbr.rel (%p2013) target = $region124
        $region123: #{tpu_custom_call.1} parent=91 // pred_region
          %s2017 = ssub.s32 256, 256
          %2018 = vsyncadd %s1995, %s2017
          %s2019 = smul.addr %s45, 2
          %s2020 = smul.addr %s2019, 128
          %s2021 = scalar_lea.hbm %s19, %s2020
          %s2023 = sshll.u32 %s1998, 4
          %s2024 = int_to_ptr.vmem [resolvable:$true] %s2023
          %2026 = dma.vmem_to_hbm [thread:$0]  %s2024, 256, %s2021, %s1995
        $region124: #{tpu_custom_call.1} parent=91 // pred_fallthru
          _
      $region92: #{tpu_custom_call.1} parent=5 // pred_fallthru
        _
      %p2027 = scmp.le.s32.totalorder 2, %s40
      // Predicated region
      $region125: #{tpu_custom_call.1} parent=5 // pred_check
        %p2028 = pneg %p2027
      $region126: #{tpu_custom_call.1} parent=5 // pred_check_branch
        %2030 = sbr.rel (%p2028) target = $region128
      $region127: #{tpu_custom_call.1} parent=5 // pred_region
        %s2031 = ssub.s32 %s40, 2
        // Predicated region
        $region129: #{tpu_custom_call.1} parent=127 // pred_check
          %p2032 = pneg %p457
        $region130: #{tpu_custom_call.1} parent=127 // pred_check_branch
          %2034 = sbr.rel (%p2032) target = $region132
        $region131: #{tpu_custom_call.1} parent=127 // pred_region
          %s2035 = sand.u32 %s442, 1
          %s2036 = scalar_lea.sflag [#allocation4], %s2035
          %s2037 = sand.u32 %s442, 1
          %s2038 = smul.addr %s2037, 8
          %s2039 = scalar_lea.vmem [#allocation13], %s2038
          %2040 = dma.done %s2036, 128
        $region132: #{tpu_custom_call.1} parent=127 // pred_fallthru
          _
        // Predicated region
        $region133: #{tpu_custom_call.1} parent=127 // pred_check
          %p2041 = pneg %p483
        $region134: #{tpu_custom_call.1} parent=127 // pred_check_branch
          %2043 = sbr.rel (%p2041) target = $region136
        $region135: #{tpu_custom_call.1} parent=127 // pred_region
          %s2044 = sand.u32 %s468, 1
          %s2045 = scalar_lea.sflag [#allocation15], %s2044
          %s2046 = sand.u32 %s468, 1
          %s2047 = smul.addr %s2046, 16
          %s2048 = scalar_lea.vmem [#allocation14], %s2047
          %2049 = dma.done %s2045, 256
        $region136: #{tpu_custom_call.1} parent=127 // pred_fallthru
          _
      $region128: #{tpu_custom_call.1} parent=5 // pred_fallthru
        _
    $region6: #{tpu_custom_call.1} parent=1 // loop_footer
      %s44 = sadd.s32 1, %s40
    $region7: #{tpu_custom_call.1} parent=1 // loop_footer_branch
      %39 = sbr.rel target = $region3
    $region8: #{tpu_custom_call.1} parent=1 // loop_exit
      _
    %2050 = vsyncpa [#allocation3], 1
    %s2051 = scalar_lea.sflag [#allocation3], 1
    %2052 = vsyncpa %s2051, 1
    %2053 = vsyncpa [#allocation6], 1
    %s2054 = scalar_lea.sflag [#allocation6], 1
    %2055 = vsyncpa %s2054, 1
    %2056 = vsyncpa [#allocation9], 1
    %2057 = vsyncpa [#allocation12], 1
    %2058 = vsyncpa [#allocation4], 1
    %s2059 = scalar_lea.sflag [#allocation4], 1
    %2060 = vsyncpa %s2059, 1
    %2061 = vsyncpa [#allocation15], 1
    %s2062 = scalar_lea.sflag [#allocation15], 1
    %2063 = vsyncpa %s2062, 1

</llo_original>
